<compile_context>
chip_gen: v6e
topology: v6e:2x2x1
jax: 0.10.0
libtpu: 0.0.40
codegen_flags: <defaults>
</compile_context>

<pallas_src>
import jax
import jax.numpy as jnp
from jax import lax
from jax.experimental import pallas as pl
from jax.experimental.pallas import tpu as pltpu

EPS = 1e-3


# ----------------------------------------------------------------------------
# Tile sizing helper
# ----------------------------------------------------------------------------
def _pick_hw_block(hw, rows, max_buf_bytes=1 << 20):
    """Pick a lane-dim (H*W) tile: full extent when small, otherwise a multiple
    of 128 (preferring one that divides hw so no padding is needed), sized so a
    single (rows, hw_blk) f32 buffer stays around <= 1 MiB (safe for v5e's
    16 MiB scoped-VMEM default with double-buffered in + out, and v7x 64 MiB).
    Returns (hw_blk, hw_padded)."""
    cap = (max_buf_bytes // (4 * max(rows, 1))) // 128 * 128
    cap = max(512, min(4096, cap))
    if hw <= cap:
        return hw, hw
    blk = cap
    while blk >= 128:
        if hw % blk == 0:
            return blk, hw
        blk -= 128
    blk = cap
    return blk, -(-hw // blk) * blk


# ----------------------------------------------------------------------------
# Pallas kernels
# ----------------------------------------------------------------------------
def _bn_stats_kernel(x_ref, sum_ref, sumsq_ref):
    """Phase 0: accumulate per-channel sum and sum-of-squares (f32)."""
    @pl.when((pl.program_id(0) == 0) & (pl.program_id(1) == 0))
    def _():
        sum_ref[...] = jnp.zeros_like(sum_ref)
        sumsq_ref[...] = jnp.zeros_like(sumsq_ref)

    x = x_ref[...].astype(jnp.float32)                     # (C, hw_blk)
    sum_ref[...] += jnp.sum(x, axis=1, keepdims=True)      # (C, 1)
    sumsq_ref[...] += jnp.sum(x * x, axis=1, keepdims=True)


def _bn_prelu_apply_kernel(x_ref, scale_ref, shift_ref, alpha_ref, o_ref):
    """Phase 1: y = x*scale + shift, then per-channel PReLU."""
    x = x_ref[...].astype(jnp.float32)                     # (C, hw_blk)
    y = x * scale_ref[...] + shift_ref[...]                # (C,1) bcast lanes
    o_ref[...] = jnp.where(y > 0, y, alpha_ref[...] * y).astype(o_ref.dtype)


def _pointwise_conv_kernel(w_ref, x_ref, o_ref):
    """1x1 conv == (Cout, Cin) @ (Cin, hw_blk) matmul on the MXU."""
    o_ref[...] = jnp.dot(w_ref[...], x_ref[...],
                         preferred_element_type=jnp.float32).astype(o_ref.dtype)


# ----------------------------------------------------------------------------
# Pallas wrappers
# ----------------------------------------------------------------------------
def bn_prelu(x, gamma, beta, alpha):
    """Fused training-mode BatchNorm2d(eps=1e-3) + per-channel PReLU.
    x: (N, C, H, W);  gamma/beta/alpha: (C,)."""
    n, c, h, w = x.shape
    hw = h * w
    x3 = x.reshape(n, c, hw)                               # free reshape
    hw_blk, hw_pad = _pick_hw_block(hw, c)
    if hw_pad != hw:
        x3 = jnp.pad(x3, ((0, 0), (0, 0), (0, hw_pad - hw)))
    t = hw_pad // hw_blk

    # ---- phase 0: per-channel sum / sum-of-squares (one pass over x) ----
    sums, sumsqs = pl.pallas_call(
        _bn_stats_kernel,
        out_shape=(jax.ShapeDtypeStruct((c, 1), jnp.float32),
                   jax.ShapeDtypeStruct((c, 1), jnp.float32)),
        grid_spec=pltpu.PrefetchScalarGridSpec(
            num_scalar_prefetch=0,
            grid=(n, t),
            in_specs=[pl.BlockSpec((None, c, hw_blk), lambda i, j: (i, 0, j))],
            out_specs=[pl.BlockSpec((c, 1), lambda i, j: (0, 0)),
                       pl.BlockSpec((c, 1), lambda i, j: (0, 0))],
        ),
        compiler_params=pltpu.CompilerParams(
            dimension_semantics=("arbitrary", "arbitrary")),
    )(x3)

    # ---- fold stats + affine into per-channel scale / shift (O(C) work) ----
    m = jnp.float32(n * hw)                                # true count (zero pad is exact)
    mean = sums[:, 0] / m
    var = jnp.maximum(sumsqs[:, 0] / m - mean * mean, 0.0)  # biased variance
    scale = gamma.astype(jnp.float32) * lax.rsqrt(var + EPS)
    shift = beta.astype(jnp.float32) - mean * scale

    # ---- phase 1: normalize + affine + PReLU, tiles fully parallel ----
    out3 = pl.pallas_call(
        _bn_prelu_apply_kernel,
        out_shape=jax.ShapeDtypeStruct((n, c, hw_pad), x.dtype),
        grid_spec=pltpu.PrefetchScalarGridSpec(
            num_scalar_prefetch=0,
            grid=(n, t),
            in_specs=[
                pl.BlockSpec((None, c, hw_blk), lambda i, j: (i, 0, j)),
                pl.BlockSpec((c, 1), lambda i, j: (0, 0)),
                pl.BlockSpec((c, 1), lambda i, j: (0, 0)),
                pl.BlockSpec((c, 1), lambda i, j: (0, 0)),
            ],
            out_specs=pl.BlockSpec((None, c, hw_blk), lambda i, j: (i, 0, j)),
        ),
        compiler_params=pltpu.CompilerParams(
            dimension_semantics=("parallel", "parallel")),
        input_output_aliases={0: 0},      # write each tile back in place
    )(x3, scale.reshape(c, 1), shift.reshape(c, 1),
      alpha.astype(jnp.float32).reshape(c, 1))

    if hw_pad != hw:
        out3 = out3[:, :, :hw]
    return out3.reshape(n, c, h, w)


def conv1x1_pallas(x, w):
    """Pointwise (1x1, bias-free) convolution: x (N,Cin,H,W), w (Cout,Cin)."""
    n, cin, h, wdim = x.shape
    cout = w.shape[0]
    hw = h * wdim
    x3 = x.reshape(n, cin, hw)
    hw_blk, hw_pad = _pick_hw_block(hw, max(cin, cout))
    if hw_pad != hw:
        x3 = jnp.pad(x3, ((0, 0), (0, 0), (0, hw_pad - hw)))
    t = hw_pad // hw_blk

    out3 = pl.pallas_call(
        _pointwise_conv_kernel,
        out_shape=jax.ShapeDtypeStruct((n, cout, hw_pad), x.dtype),
        grid_spec=pltpu.PrefetchScalarGridSpec(
            num_scalar_prefetch=0,
            grid=(n, t),
            in_specs=[
                pl.BlockSpec((cout, cin), lambda i, j: (0, 0)),
                pl.BlockSpec((None, cin, hw_blk), lambda i, j: (i, 0, j)),
            ],
            out_specs=pl.BlockSpec((None, cout, hw_blk), lambda i, j: (i, 0, j)),
        ),
        compiler_params=pltpu.CompilerParams(
            dimension_semantics=("parallel", "parallel")),
    )(w, x3)

    if hw_pad != hw:
        out3 = out3[:, :, :hw]
    return out3.reshape(n, cout, h, wdim)


# ----------------------------------------------------------------------------
# Plain-JAX pieces (spatial convs, shuffle) and the module forward
# ----------------------------------------------------------------------------
def _conv2d(x, w, padding, dilation):
    # TODO(synk): dilated spatial convs via lax.conv_general_dilated (no Pallas conv).
    return lax.conv_general_dilated(
        x, w, window_strides=(1, 1),
        padding=((padding[0], padding[0]), (padding[1], padding[1])),
        rhs_dilation=dilation,
        dimension_numbers=("NCHW", "OIHW", "NCHW"))


def channel_shuffle(x, groups):
    n, c, h, w = x.shape
    x = x.reshape(n, groups, c // groups, h, w)
    x = jnp.transpose(x, (0, 2, 1, 3, 4))
    return x.reshape(n, c, h, w)


def dab_module2_forward(x, p, bn_prelu_fn, conv1x1_fn):
    leftC = p["leftC"]
    d0, d1 = p["d"]
    y0 = bn_prelu_fn(x, p["g_0"], p["b_0"], p["a_0"])
    xl = y0[:, :leftC, :, :]
    xr = y0[:, leftC:, :, :]
    br11 = bn_prelu_fn(_conv2d(xl, p["w_d31"], (d0, 0), (d0, 1)),
                       p["g_d31"], p["b_d31"], p["a_d31"])
    br21 = bn_prelu_fn(_conv2d(xr, p["w_dd31"], (d1, 0), (d1, 1)),
                       p["g_dd31"], p["b_dd31"], p["a_dd31"])
    b1 = br11 + br21
    br1 = bn_prelu_fn(_conv2d(b1, p["w_d13"], (0, d0), (1, d0)),
                      p["g_d13"], p["b_d13"], p["a_d13"])
    br2 = bn_prelu_fn(_conv2d(b1, p["w_dd13"], (0, d1), (1, d1)),
                      p["g_dd13"], p["b_dd13"], p["a_dd13"])
    br3 = bn_prelu_fn(_conv2d(y0, p["w_33"], (1, 1), (1, 1)),
                      p["g_33"], p["b_33"], p["a_33"])
    cat = jnp.concatenate([br1, br2, br3, y0], axis=1)
    out = conv1x1_fn(cat, p["w_11"])
    return channel_shuffle(out, p["nIn"])


# ----------------------------------------------------------------------------
# Pure-JAX reference (for validation)
# ----------------------------------------------------------------------------
def _bn_prelu_ref(x, gamma, beta, alpha):
    mean = jnp.mean(x, axis=(0, 2, 3), keepdims=True)
    var = jnp.mean((x - mean) ** 2, axis=(0, 2, 3), keepdims=True)
    y = (x - mean) / jnp.sqrt(var + EPS)
    y = y * gamma[None, :, None, None] + beta[None, :, None, None]
    return jnp.where(y > 0, y, alpha[None, :, None, None] * y)


def _conv1x1_ref(x, w):
    return jnp.einsum("oc,nchw->nohw", w, x)


# ----------------------------------------------------------------------------
# Test
# ----------------------------------------------------------------------------
if __name__ == "__main__":
    key = jax.random.PRNGKey(0)
    keys = jax.random.split(key, 8)

    N, C, H, W = 2, 4, 16, 16
    d = (1, 2)
    leftC = round(C * 0.5)
    rightC = C - leftC

    x = jax.random.normal(keys[0], (N, C, H, W), dtype=jnp.float32)

    def _w(k, shape):
        return 0.2 * jax.random.normal(k, shape, dtype=jnp.float32)

    params = {
        "nIn": C, "leftC": leftC, "d": d,
        "w_d31": _w(keys[1], (rightC, rightC, 3, 1)),
        "w_dd31": _w(keys[2], (leftC, leftC, 3, 1)),
        "w_d13": _w(keys[3], (rightC, rightC, 1, 3)),
        "w_dd13": _w(keys[4], (leftC, leftC, 1, 3)),
        "w_33": _w(keys[5], (C, C, 3, 3)),
        "w_11": _w(keys[6], (C, 3 * C)),
    }
    # BN / PReLU params at PyTorch-default init (weight=1, bias=0, slope=0.25)
    for name, ch in (("0", C), ("d31", rightC), ("dd31", leftC),
                     ("d13", rightC), ("dd13", leftC), ("33", C)):
        params["g_" + name] = jnp.ones((ch,), jnp.float32)
        params["b_" + name] = jnp.zeros((ch,), jnp.float32)
        params["a_" + name] = jnp.full((ch,), 0.25, jnp.float32)

    fwd = jax.jit(lambda t: dab_module2_forward(t, params, bn_prelu,
                                                conv1x1_pallas))
    out = jax.block_until_ready(fwd(x))

    ref = dab_module2_forward(x, params, _bn_prelu_ref, _conv1x1_ref)
    assert out.shape == (N, C, H, W)
    err = float(jnp.max(jnp.abs(out - ref)))
    assert err < 2e-3, f"max abs error {err}"
    print("KERNEL_OK")
</pallas_src>

<mosaic_0001>
module attributes {stable_mosaic.version = 11 : i64} {
  func.func @_bn_stats_kernel(%arg0: i32, %arg1: i32, %arg2: memref<1x4x256xf32, #tpu.memory_space<vmem>>, %arg3: memref<4x1xf32, #tpu.memory_space<vmem>>, %arg4: memref<4x1xf32, #tpu.memory_space<vmem>>) attributes {dimension_semantics = [#tpu.dimension_semantics<arbitrary>, #tpu.dimension_semantics<arbitrary>], iteration_bounds = array<i64: 2, 1>, scalar_prefetch = 0 : i64, scratch_operands = 0 : i64, tpu.core_type = #tpu.core_type<tc>, window_params = [{transform_indices = @transform_0, window_bounds = array<i64: 1, 4, 256>}, {pipeline_mode = #tpu.pipeline_mode<synchronous>, transform_indices = @transform_1, window_bounds = array<i64: 4, 1>}, {pipeline_mode = #tpu.pipeline_mode<synchronous>, transform_indices = @transform_2, window_bounds = array<i64: 4, 1>}]} {
    %c0_i32 = arith.constant 0 : i32
    %0 = arith.cmpi eq, %arg0, %c0_i32 : i32
    %c0_i32_0 = arith.constant 0 : i32
    %1 = arith.cmpi eq, %arg1, %c0_i32_0 : i32
    %2 = arith.andi %0, %1 : i1
    %3 = arith.extui %2 : i1 to i32
    %c0_i32_1 = arith.constant 0 : i32
    %4 = arith.cmpi ne, %3, %c0_i32_1 : i32
    scf.if %4 {
      %cst_13 = arith.constant 0.000000e+00 : f32
      %18 = vector.broadcast %cst_13 : f32 to vector<4x1xf32>
      %c0_14 = arith.constant 0 : index
      %c0_15 = arith.constant 0 : index
      %19 = vector.load %arg3[%c0_14, %c0_15] : memref<4x1xf32, #tpu.memory_space<vmem>>, vector<4x1xf32>
      tpu.vector_store %arg3[%c0_14, %c0_15], %18 {strides = array<i32>} : memref<4x1xf32, #tpu.memory_space<vmem>>, vector<4x1xf32>,
      %cst_16 = arith.constant 0.000000e+00 : f32
      %20 = vector.broadcast %cst_16 : f32 to vector<4x1xf32>
      %c0_17 = arith.constant 0 : index
      %c0_18 = arith.constant 0 : index
      %21 = vector.load %arg4[%c0_17, %c0_18] : memref<4x1xf32, #tpu.memory_space<vmem>>, vector<4x1xf32>
      tpu.vector_store %arg4[%c0_17, %c0_18], %20 {strides = array<i32>} : memref<4x1xf32, #tpu.memory_space<vmem>>, vector<4x1xf32>,
    } else {
    }
    %c0 = arith.constant 0 : index
    %c0_2 = arith.constant 0 : index
    %c0_3 = arith.constant 0 : index
    %5 = vector.load %arg2[%c0, %c0_2, %c0_3] : memref<1x4x256xf32, #tpu.memory_space<vmem>>, vector<1x4x256xf32>
    %6 = vector.shape_cast %5 : vector<1x4x256xf32> to vector<4x256xf32>
    %c0_4 = arith.constant 0 : index
    %c0_5 = arith.constant 0 : index
    %7 = vector.load %arg3[%c0_4, %c0_5] : memref<4x1xf32, #tpu.memory_space<vmem>>, vector<4x1xf32>
    %cst = arith.constant dense<0.000000e+00> : vector<4xf32>
    %8 = vector.multi_reduction <add>, %6, %cst [1] : vector<4x256xf32> to vector<4xf32>
    %9 = vector.shape_cast %8 : vector<4xf32> to vector<4x1xf32>
    %10 = arith.addf %7, %9 : vector<4x1xf32>
    %c0_6 = arith.constant 0 : index
    %c0_7 = arith.constant 0 : index
    %11 = vector.load %arg3[%c0_6, %c0_7] : memref<4x1xf32, #tpu.memory_space<vmem>>, vector<4x1xf32>
    tpu.vector_store %arg3[%c0_6, %c0_7], %10 {strides = array<i32>} : memref<4x1xf32, #tpu.memory_space<vmem>>, vector<4x1xf32>,
    %c0_8 = arith.constant 0 : index
    %c0_9 = arith.constant 0 : index
    %12 = vector.load %arg4[%c0_8, %c0_9] : memref<4x1xf32, #tpu.memory_space<vmem>>, vector<4x1xf32>
    %13 = arith.mulf %6, %6 : vector<4x256xf32>
    %cst_10 = arith.constant dense<0.000000e+00> : vector<4xf32>
    %14 = vector.multi_reduction <add>, %13, %cst_10 [1] : vector<4x256xf32> to vector<4xf32>
    %15 = vector.shape_cast %14 : vector<4xf32> to vector<4x1xf32>
    %16 = arith.addf %12, %15 : vector<4x1xf32>
    %c0_11 = arith.constant 0 : index
    %c0_12 = arith.constant 0 : index
    %17 = vector.load %arg4[%c0_11, %c0_12] : memref<4x1xf32, #tpu.memory_space<vmem>>, vector<4x1xf32>
    tpu.vector_store %arg4[%c0_11, %c0_12], %16 {strides = array<i32>} : memref<4x1xf32, #tpu.memory_space<vmem>>, vector<4x1xf32>,
    return
  }
  func.func @transform_0(%arg0: i32, %arg1: i32) -> (i32, i32, i32) {
    %c0_i32 = arith.constant 0 : i32
    %c0_i32_0 = arith.constant 0 : i32
    return %arg0, %c0_i32, %arg1 : i32, i32, i32
  }
  func.func @transform_1(%arg0: i32, %arg1: i32) -> (i32, i32) {
    %c0_i32 = arith.constant 0 : i32
    %c0_i32_0 = arith.constant 0 : i32
    %c0_i32_1 = arith.constant 0 : i32
    return %c0_i32, %c0_i32_0 : i32, i32
  }
  func.func @transform_2(%arg0: i32, %arg1: i32) -> (i32, i32) {
    %c0_i32 = arith.constant 0 : i32
    %c0_i32_0 = arith.constant 0 : i32
    %c0_i32_1 = arith.constant 0 : i32
    return %c0_i32, %c0_i32_0 : i32, i32
  }
}

module attributes {stable_mosaic.version = 11 : i64} {
  func.func @_bn_prelu_apply_kernel(%arg0: i32, %arg1: i32, %arg2: memref<1x4x256xf32, #tpu.memory_space<vmem>>, %arg3: memref<4x1xf32, #tpu.memory_space<vmem>>, %arg4: memref<4x1xf32, #tpu.memory_space<vmem>>, %arg5: memref<4x1xf32, #tpu.memory_space<vmem>>, %arg6: memref<1x4x256xf32, #tpu.memory_space<vmem>>) attributes {dimension_semantics = [#tpu.dimension_semantics<parallel>, #tpu.dimension_semantics<parallel>], iteration_bounds = array<i64: 2, 1>, scalar_prefetch = 0 : i64, scratch_operands = 0 : i64, tpu.core_type = #tpu.core_type<tc>, window_params = [{transform_indices = @transform_0, window_bounds = array<i64: 1, 4, 256>}, {pipeline_mode = #tpu.pipeline_mode<synchronous>, transform_indices = @transform_1, window_bounds = array<i64: 4, 1>}, {pipeline_mode = #tpu.pipeline_mode<synchronous>, transform_indices = @transform_2, window_bounds = array<i64: 4, 1>}, {pipeline_mode = #tpu.pipeline_mode<synchronous>, transform_indices = @transform_3, window_bounds = array<i64: 4, 1>}, {transform_indices = @transform_4, window_bounds = array<i64: 1, 4, 256>}]} {
    %c0 = arith.constant 0 : index
    %c0_0 = arith.constant 0 : index
    %c0_1 = arith.constant 0 : index
    %0 = vector.load %arg2[%c0, %c0_0, %c0_1] : memref<1x4x256xf32, #tpu.memory_space<vmem>>, vector<1x4x256xf32>
    %1 = vector.shape_cast %0 : vector<1x4x256xf32> to vector<4x256xf32>
    %c0_2 = arith.constant 0 : index
    %c0_3 = arith.constant 0 : index
    %2 = vector.load %arg3[%c0_2, %c0_3] : memref<4x1xf32, #tpu.memory_space<vmem>>, vector<4x1xf32>
    %3 = vector.broadcast %2 : vector<4x1xf32> to vector<4x256xf32>
    %4 = arith.mulf %1, %3 : vector<4x256xf32>
    %c0_4 = arith.constant 0 : index
    %c0_5 = arith.constant 0 : index
    %5 = vector.load %arg4[%c0_4, %c0_5] : memref<4x1xf32, #tpu.memory_space<vmem>>, vector<4x1xf32>
    %6 = vector.broadcast %5 : vector<4x1xf32> to vector<4x256xf32>
    %7 = arith.addf %4, %6 : vector<4x256xf32>
    %cst = arith.constant 0.000000e+00 : f32
    %8 = vector.broadcast %cst : f32 to vector<4x256xf32>
    %9 = arith.cmpf ogt, %7, %8 : vector<4x256xf32>
    %c0_6 = arith.constant 0 : index
    %c0_7 = arith.constant 0 : index
    %10 = vector.load %arg5[%c0_6, %c0_7] : memref<4x1xf32, #tpu.memory_space<vmem>>, vector<4x1xf32>
    %11 = vector.broadcast %10 : vector<4x1xf32> to vector<4x256xf32>
    %12 = arith.mulf %11, %7 : vector<4x256xf32>
    %13 = arith.select %9, %7, %12 : vector<4x256xi1>, vector<4x256xf32>
    %c0_8 = arith.constant 0 : index
    %c0_9 = arith.constant 0 : index
    %c0_10 = arith.constant 0 : index
    %14 = vector.load %arg6[%c0_8, %c0_9, %c0_10] : memref<1x4x256xf32, #tpu.memory_space<vmem>>, vector<1x4x256xf32>
    %15 = vector.shape_cast %14 : vector<1x4x256xf32> to vector<4x256xf32>
    %16 = vector.shape_cast %13 : vector<4x256xf32> to vector<1x4x256xf32>
    tpu.vector_store %arg6[%c0_8, %c0_9, %c0_10], %16 {strides = array<i32>} : memref<1x4x256xf32, #tpu.memory_space<vmem>>, vector<1x4x256xf32>,
    return
  }
  func.func @transform_0(%arg0: i32, %arg1: i32) -> (i32, i32, i32) {
    %c0_i32 = arith.constant 0 : i32
    %c0_i32_0 = arith.constant 0 : i32
    return %arg0, %c0_i32, %arg1 : i32, i32, i32
  }
  func.func @transform_1(%arg0: i32, %arg1: i32) -> (i32, i32) {
    %c0_i32 = arith.constant 0 : i32
    %c0_i32_0 = arith.constant 0 : i32
    %c0_i32_1 = arith.constant 0 : i32
    return %c0_i32, %c0_i32_0 : i32, i32
  }
  func.func @transform_2(%arg0: i32, %arg1: i32) -> (i32, i32) {
    %c0_i32 = arith.constant 0 : i32
    %c0_i32_0 = arith.constant 0 : i32
    %c0_i32_1 = arith.constant 0 : i32
    return %c0_i32, %c0_i32_0 : i32, i32
  }
  func.func @transform_3(%arg0: i32, %arg1: i32) -> (i32, i32) {
    %c0_i32 = arith.constant 0 : i32
    %c0_i32_0 = arith.constant 0 : i32
    %c0_i32_1 = arith.constant 0 : i32
    return %c0_i32, %c0_i32_0 : i32, i32
  }
  func.func @transform_4(%arg0: i32, %arg1: i32) -> (i32, i32, i32) {
    %c0_i32 = arith.constant 0 : i32
    %c0_i32_0 = arith.constant 0 : i32
    return %arg0, %c0_i32, %arg1 : i32, i32, i32
  }
}

module attributes {stable_mosaic.version = 11 : i64} {
  func.func @_bn_stats_kernel(%arg0: i32, %arg1: i32, %arg2: memref<1x2x256xf32, #tpu.memory_space<vmem>>, %arg3: memref<2x1xf32, #tpu.memory_space<vmem>>, %arg4: memref<2x1xf32, #tpu.memory_space<vmem>>) attributes {dimension_semantics = [#tpu.dimension_semantics<arbitrary>, #tpu.dimension_semantics<arbitrary>], iteration_bounds = array<i64: 2, 1>, scalar_prefetch = 0 : i64, scratch_operands = 0 : i64, tpu.core_type = #tpu.core_type<tc>, window_params = [{transform_indices = @transform_0, window_bounds = array<i64: 1, 2, 256>}, {pipeline_mode = #tpu.pipeline_mode<synchronous>, transform_indices = @transform_1, window_bounds = array<i64: 2, 1>}, {pipeline_mode = #tpu.pipeline_mode<synchronous>, transform_indices = @transform_2, window_bounds = array<i64: 2, 1>}]} {
    %c0_i32 = arith.constant 0 : i32
    %0 = arith.cmpi eq, %arg0, %c0_i32 : i32
    %c0_i32_0 = arith.constant 0 : i32
    %1 = arith.cmpi eq, %arg1, %c0_i32_0 : i32
    %2 = arith.andi %0, %1 : i1
    %3 = arith.extui %2 : i1 to i32
    %c0_i32_1 = arith.constant 0 : i32
    %4 = arith.cmpi ne, %3, %c0_i32_1 : i32
    scf.if %4 {
      %cst_13 = arith.constant 0.000000e+00 : f32
      %18 = vector.broadcast %cst_13 : f32 to vector<2x1xf32>
      %c0_14 = arith.constant 0 : index
      %c0_15 = arith.constant 0 : index
      %19 = vector.load %arg3[%c0_14, %c0_15] : memref<2x1xf32, #tpu.memory_space<vmem>>, vector<2x1xf32>
      tpu.vector_store %arg3[%c0_14, %c0_15], %18 {strides = array<i32>} : memref<2x1xf32, #tpu.memory_space<vmem>>, vector<2x1xf32>,
      %cst_16 = arith.constant 0.000000e+00 : f32
      %20 = vector.broadcast %cst_16 : f32 to vector<2x1xf32>
      %c0_17 = arith.constant 0 : index
      %c0_18 = arith.constant 0 : index
      %21 = vector.load %arg4[%c0_17, %c0_18] : memref<2x1xf32, #tpu.memory_space<vmem>>, vector<2x1xf32>
      tpu.vector_store %arg4[%c0_17, %c0_18], %20 {strides = array<i32>} : memref<2x1xf32, #tpu.memory_space<vmem>>, vector<2x1xf32>,
    } else {
    }
    %c0 = arith.constant 0 : index
    %c0_2 = arith.constant 0 : index
    %c0_3 = arith.constant 0 : index
    %5 = vector.load %arg2[%c0, %c0_2, %c0_3] : memref<1x2x256xf32, #tpu.memory_space<vmem>>, vector<1x2x256xf32>
    %6 = vector.shape_cast %5 : vector<1x2x256xf32> to vector<2x256xf32>
    %c0_4 = arith.constant 0 : index
    %c0_5 = arith.constant 0 : index
    %7 = vector.load %arg3[%c0_4, %c0_5] : memref<2x1xf32, #tpu.memory_space<vmem>>, vector<2x1xf32>
    %cst = arith.constant dense<0.000000e+00> : vector<2xf32>
    %8 = vector.multi_reduction <add>, %6, %cst [1] : vector<2x256xf32> to vector<2xf32>
    %9 = vector.shape_cast %8 : vector<2xf32> to vector<2x1xf32>
    %10 = arith.addf %7, %9 : vector<2x1xf32>
    %c0_6 = arith.constant 0 : index
    %c0_7 = arith.constant 0 : index
    %11 = vector.load %arg3[%c0_6, %c0_7] : memref<2x1xf32, #tpu.memory_space<vmem>>, vector<2x1xf32>
    tpu.vector_store %arg3[%c0_6, %c0_7], %10 {strides = array<i32>} : memref<2x1xf32, #tpu.memory_space<vmem>>, vector<2x1xf32>,
    %c0_8 = arith.constant 0 : index
    %c0_9 = arith.constant 0 : index
    %12 = vector.load %arg4[%c0_8, %c0_9] : memref<2x1xf32, #tpu.memory_space<vmem>>, vector<2x1xf32>
    %13 = arith.mulf %6, %6 : vector<2x256xf32>
    %cst_10 = arith.constant dense<0.000000e+00> : vector<2xf32>
    %14 = vector.multi_reduction <add>, %13, %cst_10 [1] : vector<2x256xf32> to vector<2xf32>
    %15 = vector.shape_cast %14 : vector<2xf32> to vector<2x1xf32>
    %16 = arith.addf %12, %15 : vector<2x1xf32>
    %c0_11 = arith.constant 0 : index
    %c0_12 = arith.constant 0 : index
    %17 = vector.load %arg4[%c0_11, %c0_12] : memref<2x1xf32, #tpu.memory_space<vmem>>, vector<2x1xf32>
    tpu.vector_store %arg4[%c0_11, %c0_12], %16 {strides = array<i32>} : memref<2x1xf32, #tpu.memory_space<vmem>>, vector<2x1xf32>,
    return
  }
  func.func @transform_0(%arg0: i32, %arg1: i32) -> (i32, i32, i32) {
    %c0_i32 = arith.constant 0 : i32
    %c0_i32_0 = arith.constant 0 : i32
    return %arg0, %c0_i32, %arg1 : i32, i32, i32
  }
  func.func @transform_1(%arg0: i32, %arg1: i32) -> (i32, i32) {
    %c0_i32 = arith.constant 0 : i32
    %c0_i32_0 = arith.constant 0 : i32
    %c0_i32_1 = arith.constant 0 : i32
    return %c0_i32, %c0_i32_0 : i32, i32
  }
  func.func @transform_2(%arg0: i32, %arg1: i32) -> (i32, i32) {
    %c0_i32 = arith.constant 0 : i32
    %c0_i32_0 = arith.constant 0 : i32
    %c0_i32_1 = arith.constant 0 : i32
    return %c0_i32, %c0_i32_0 : i32, i32
  }
}

module attributes {stable_mosaic.version = 11 : i64} {
  func.func @_bn_prelu_apply_kernel(%arg0: i32, %arg1: i32, %arg2: memref<1x2x256xf32, #tpu.memory_space<vmem>>, %arg3: memref<2x1xf32, #tpu.memory_space<vmem>>, %arg4: memref<2x1xf32, #tpu.memory_space<vmem>>, %arg5: memref<2x1xf32, #tpu.memory_space<vmem>>, %arg6: memref<1x2x256xf32, #tpu.memory_space<vmem>>) attributes {dimension_semantics = [#tpu.dimension_semantics<parallel>, #tpu.dimension_semantics<parallel>], iteration_bounds = array<i64: 2, 1>, scalar_prefetch = 0 : i64, scratch_operands = 0 : i64, tpu.core_type = #tpu.core_type<tc>, window_params = [{transform_indices = @transform_0, window_bounds = array<i64: 1, 2, 256>}, {pipeline_mode = #tpu.pipeline_mode<synchronous>, transform_indices = @transform_1, window_bounds = array<i64: 2, 1>}, {pipeline_mode = #tpu.pipeline_mode<synchronous>, transform_indices = @transform_2, window_bounds = array<i64: 2, 1>}, {pipeline_mode = #tpu.pipeline_mode<synchronous>, transform_indices = @transform_3, window_bounds = array<i64: 2, 1>}, {transform_indices = @transform_4, window_bounds = array<i64: 1, 2, 256>}]} {
    %c0 = arith.constant 0 : index
    %c0_0 = arith.constant 0 : index
    %c0_1 = arith.constant 0 : index
    %0 = vector.load %arg2[%c0, %c0_0, %c0_1] : memref<1x2x256xf32, #tpu.memory_space<vmem>>, vector<1x2x256xf32>
    %1 = vector.shape_cast %0 : vector<1x2x256xf32> to vector<2x256xf32>
    %c0_2 = arith.constant 0 : index
    %c0_3 = arith.constant 0 : index
    %2 = vector.load %arg3[%c0_2, %c0_3] : memref<2x1xf32, #tpu.memory_space<vmem>>, vector<2x1xf32>
    %3 = vector.broadcast %2 : vector<2x1xf32> to vector<2x256xf32>
    %4 = arith.mulf %1, %3 : vector<2x256xf32>
    %c0_4 = arith.constant 0 : index
    %c0_5 = arith.constant 0 : index
    %5 = vector.load %arg4[%c0_4, %c0_5] : memref<2x1xf32, #tpu.memory_space<vmem>>, vector<2x1xf32>
    %6 = vector.broadcast %5 : vector<2x1xf32> to vector<2x256xf32>
    %7 = arith.addf %4, %6 : vector<2x256xf32>
    %cst = arith.constant 0.000000e+00 : f32
    %8 = vector.broadcast %cst : f32 to vector<2x256xf32>
    %9 = arith.cmpf ogt, %7, %8 : vector<2x256xf32>
    %c0_6 = arith.constant 0 : index
    %c0_7 = arith.constant 0 : index
    %10 = vector.load %arg5[%c0_6, %c0_7] : memref<2x1xf32, #tpu.memory_space<vmem>>, vector<2x1xf32>
    %11 = vector.broadcast %10 : vector<2x1xf32> to vector<2x256xf32>
    %12 = arith.mulf %11, %7 : vector<2x256xf32>
    %13 = arith.select %9, %7, %12 : vector<2x256xi1>, vector<2x256xf32>
    %c0_8 = arith.constant 0 : index
    %c0_9 = arith.constant 0 : index
    %c0_10 = arith.constant 0 : index
    %14 = vector.load %arg6[%c0_8, %c0_9, %c0_10] : memref<1x2x256xf32, #tpu.memory_space<vmem>>, vector<1x2x256xf32>
    %15 = vector.shape_cast %14 : vector<1x2x256xf32> to vector<2x256xf32>
    %16 = vector.shape_cast %13 : vector<2x256xf32> to vector<1x2x256xf32>
    tpu.vector_store %arg6[%c0_8, %c0_9, %c0_10], %16 {strides = array<i32>} : memref<1x2x256xf32, #tpu.memory_space<vmem>>, vector<1x2x256xf32>,
    return
  }
  func.func @transform_0(%arg0: i32, %arg1: i32) -> (i32, i32, i32) {
    %c0_i32 = arith.constant 0 : i32
    %c0_i32_0 = arith.constant 0 : i32
    return %arg0, %c0_i32, %arg1 : i32, i32, i32
  }
  func.func @transform_1(%arg0: i32, %arg1: i32) -> (i32, i32) {
    %c0_i32 = arith.constant 0 : i32
    %c0_i32_0 = arith.constant 0 : i32
    %c0_i32_1 = arith.constant 0 : i32
    return %c0_i32, %c0_i32_0 : i32, i32
  }
  func.func @transform_2(%arg0: i32, %arg1: i32) -> (i32, i32) {
    %c0_i32 = arith.constant 0 : i32
    %c0_i32_0 = arith.constant 0 : i32
    %c0_i32_1 = arith.constant 0 : i32
    return %c0_i32, %c0_i32_0 : i32, i32
  }
  func.func @transform_3(%arg0: i32, %arg1: i32) -> (i32, i32) {
    %c0_i32 = arith.constant 0 : i32
    %c0_i32_0 = arith.constant 0 : i32
    %c0_i32_1 = arith.constant 0 : i32
    return %c0_i32, %c0_i32_0 : i32, i32
  }
  func.func @transform_4(%arg0: i32, %arg1: i32) -> (i32, i32, i32) {
    %c0_i32 = arith.constant 0 : i32
    %c0_i32_0 = arith.constant 0 : i32
    return %arg0, %c0_i32, %arg1 : i32, i32, i32
  }
}

module attributes {stable_mosaic.version = 11 : i64} {
  func.func @_pointwise_conv_kernel(%arg0: i32, %arg1: i32, %arg2: memref<4x12xf32, #tpu.memory_space<vmem>>, %arg3: memref<1x12x256xf32, #tpu.memory_space<vmem>>, %arg4: memref<1x4x256xf32, #tpu.memory_space<vmem>>) attributes {dimension_semantics = [#tpu.dimension_semantics<parallel>, #tpu.dimension_semantics<parallel>], iteration_bounds = array<i64: 2, 1>, scalar_prefetch = 0 : i64, scratch_operands = 0 : i64, tpu.core_type = #tpu.core_type<tc>, window_params = [{pipeline_mode = #tpu.pipeline_mode<synchronous>, transform_indices = @transform_0, window_bounds = array<i64: 4, 12>}, {transform_indices = @transform_1, window_bounds = array<i64: 1, 12, 256>}, {transform_indices = @transform_2, window_bounds = array<i64: 1, 4, 256>}]} {
    %c0 = arith.constant 0 : index
    %c0_0 = arith.constant 0 : index
    %0 = vector.load %arg2[%c0, %c0_0] : memref<4x12xf32, #tpu.memory_space<vmem>>, vector<4x12xf32>
    %c0_1 = arith.constant 0 : index
    %c0_2 = arith.constant 0 : index
    %c0_3 = arith.constant 0 : index
    %1 = vector.load %arg3[%c0_1, %c0_2, %c0_3] : memref<1x12x256xf32, #tpu.memory_space<vmem>>, vector<1x12x256xf32>
    %2 = vector.shape_cast %1 : vector<1x12x256xf32> to vector<12x256xf32>
    %cst = arith.constant dense<0.000000e+00> : vector<4x256xf32>
    %3 = tpu.matmul %0, %2, %cst {dimension_numbers = #tpu.dot_dimension_numbers<[1], [0], [0], [1], [0, 0, 1, 1], [], []>} : vector<4x12xf32>, vector<12x256xf32>, vector<4x256xf32> -> vector<4x256xf32>
    %c0_4 = arith.constant 0 : index
    %c0_5 = arith.constant 0 : index
    %c0_6 = arith.constant 0 : index
    %4 = vector.load %arg4[%c0_4, %c0_5, %c0_6] : memref<1x4x256xf32, #tpu.memory_space<vmem>>, vector<1x4x256xf32>
    %5 = vector.shape_cast %4 : vector<1x4x256xf32> to vector<4x256xf32>
    %6 = vector.shape_cast %3 : vector<4x256xf32> to vector<1x4x256xf32>
    tpu.vector_store %arg4[%c0_4, %c0_5, %c0_6], %6 {strides = array<i32>} : memref<1x4x256xf32, #tpu.memory_space<vmem>>, vector<1x4x256xf32>,
    return
  }
  func.func @transform_0(%arg0: i32, %arg1: i32) -> (i32, i32) {
    %c0_i32 = arith.constant 0 : i32
    %c0_i32_0 = arith.constant 0 : i32
    %c0_i32_1 = arith.constant 0 : i32
    return %c0_i32, %c0_i32_0 : i32, i32
  }
  func.func @transform_1(%arg0: i32, %arg1: i32) -> (i32, i32, i32) {
    %c0_i32 = arith.constant 0 : i32
    %c0_i32_0 = arith.constant 0 : i32
    return %arg0, %c0_i32, %arg1 : i32, i32, i32
  }
  func.func @transform_2(%arg0: i32, %arg1: i32) -> (i32, i32, i32) {
    %c0_i32 = arith.constant 0 : i32
    %c0_i32_0 = arith.constant 0 : i32
    return %arg0, %c0_i32, %arg1 : i32, i32, i32
  }
}

</mosaic_0001>

<llo_original>
// kernel: _lambda_.13
$region0: #{_lambda_.13}
  #allocation0 [shape = 'u32[]', space=smem, size = 0x4, offset = 0x4, fixed_abs, tag = 'smem constant byte address 0x4 - core index']
  #allocation1 [shape = 'u32[144,128]{1,0:T(1,128)}', space=vmem, size = 0x12000, scoped, tag = 'internal scratch']
  %s0 = inlined_call_operand.vmem [shape: f32[2,4,256], index: 0, kind: input, shape index: {}]
  %s1 = inlined_call_operand.vmem [shape: f32[4,1], index: 1, kind: output, shape index: {0}]
  %s2 = inlined_call_operand.vmem [shape: f32[4,1], index: 2, kind: output, shape index: {1}]
  %3 = xla_tuple %s1, %s2
  %s4 = sld [smem:[#allocation0]]
  $region49: #{_lambda_.13} parent=0
    _
  %s6 = ssub.s32 1, %s4
  %s7 = scalar_select 0, %s6, %s4
  loop: start=0, step=1, limit=4
  $region2: #{_lambda_.13} parent=0 // loop_pre_header
    _
  $region3: #{_lambda_.13} parent=0 // loop_header
    %s9 = sphi 0, %s13
    %p10 = scmp.ge.s32.totalorder %s9, 4
    %s16 = sphi 0, %s28
    %s17 = sphi 0, %s24
    %s18 = sphi 0, %s16
    %s19 = sphi 0, %s17
    %s20 = sphi 0, %s18
    %s21 = sphi 0, %s19
    %s33 = sphi 0, %s35
    %s36 = sphi 0, %s33
    %s37 = sphi 0, %s36
    %s53 = sphi 0, %s37
    %s57 = sphi 0, %s57
    %s59 = sphi 0, %s57
    %s60 = sphi 0, %s59
    %s74 = sphi 0, %s60
    %s78 = sphi 0, %s78
    %s80 = sphi 0, %s78
    %s81 = sphi 0, %s80
    %s95 = sphi 0, %s81
  $region4: #{_lambda_.13} parent=0 // loop_header_branch
    %12 = sbr.rel (%p10) target = $region8
  $region5: #{_lambda_.13} parent=0 // loop_body
    %s14 = ssub.s32 %s9, 1
    %s15 = ssub.s32 %s9, 2
    %s22 = sadd.s32 1, %s17
    %p23 = scmp.ge.s32.totalorder %s22, 1
    %s24 = scalar_select %p23, 0, %s22
    %s25 = sadd.s32 1, %s16
    %s26 = scalar_select %p23, %s25, %s16
    %p27 = scmp.ge.s32.totalorder %s26, 2
    %s28 = scalar_select %p27, 0, %s26
    %s29 = ssub.s32 %s16, %s28
    %s30 = ssub.s32 %s17, %s24
    %s31 = sor.u32 %s29, %s30
    %p32 = scmp.eq.s32.totalorder %s31, 0
    %s34 = sadd.s32 %s33, 1
    %s35 = scalar_select %p32, %s33, %s34
    %p38 = pneg %p32
    %p39 = scmp.eq.s32.totalorder %s9, 1
    %p40 = por %p38, %p39
    %p41 = scmp.ne.s32.totalorder %s33, %s36
    %p42 = scmp.eq.s32.totalorder %s9, 0
    %p43 = por %p41, %p42
    %p44 = scmp.ne.s32.totalorder %s33, %s36
    %p45 = scmp.eq.s32.totalorder %s14, 1
    %p46 = por %p44, %p45
    %p47 = scmp.ne.s32.totalorder %s36, %s37
    %p48 = scmp.eq.s32.totalorder %s14, 0
    %p49 = por %p47, %p48
    %p50 = scmp.ne.s32.totalorder %s36, %s37
    %p51 = scmp.eq.s32.totalorder %s15, 1
    %p52 = por %p50, %p51
    %p54 = scmp.ne.s32.totalorder %s37, %s53
    %p55 = scmp.eq.s32.totalorder %s15, 0
    %p56 = por %p54, %p55
    %s58 = sadd.s32 %s57, 1
    %p61 = scmp.eq.s32.totalorder %s9, 1
    %p62 = scmp.ne.s32.totalorder %s57, %s59
    %p63 = scmp.eq.s32.totalorder %s9, 0
    %p64 = por %p62, %p63
    %p65 = scmp.ne.s32.totalorder %s57, %s59
    %p66 = scmp.eq.s32.totalorder %s14, 1
    %p67 = por %p65, %p66
    %p68 = scmp.ne.s32.totalorder %s59, %s60
    %p69 = scmp.eq.s32.totalorder %s14, 0
    %p70 = por %p68, %p69
    %p71 = scmp.ne.s32.totalorder %s59, %s60
    %p72 = scmp.eq.s32.totalorder %s15, 1
    %p73 = por %p71, %p72
    %p75 = scmp.ne.s32.totalorder %s60, %s74
    %p76 = scmp.eq.s32.totalorder %s15, 0
    %p77 = por %p75, %p76
    %s79 = sadd.s32 %s78, 1
    %p82 = scmp.eq.s32.totalorder %s9, 1
    %p83 = scmp.ne.s32.totalorder %s78, %s80
    %p84 = scmp.eq.s32.totalorder %s9, 0
    %p85 = por %p83, %p84
    %p86 = scmp.ne.s32.totalorder %s78, %s80
    %p87 = scmp.eq.s32.totalorder %s14, 1
    %p88 = por %p86, %p87
    %p89 = scmp.ne.s32.totalorder %s80, %s81
    %p90 = scmp.eq.s32.totalorder %s14, 0
    %p91 = por %p89, %p90
    %p92 = scmp.ne.s32.totalorder %s80, %s81
    %p93 = scmp.eq.s32.totalorder %s15, 1
    %p94 = por %p92, %p93
    %p96 = scmp.ne.s32.totalorder %s81, %s95
    %p97 = scmp.eq.s32.totalorder %s15, 0
    %p98 = por %p96, %p97
    %p99 = scmp.le.s32.totalorder 1, %s9
    %p100 = scmp.lt.s32.totalorder %s9, 3
    %p101 = pnand %p99, %p100
    %p102 = pneg %p101
    // Predicated region
    $region9: #{_lambda_.13} parent=5 // pred_check
      _
    $region10: #{_lambda_.13} parent=5 // pred_check_branch
      %104 = sbr.rel (%p101) target = $region12
    $region11: #{_lambda_.13} parent=5 // pred_region
      %s105 = ssub.s32 %s9, 1
    $region12: #{_lambda_.13} parent=5 // pred_fallthru
      _
    %p106 = scmp.lt.s32.totalorder %s9, 2
    // Predicated region
    $region13: #{_lambda_.13} parent=5 // pred_check
      %p107 = pneg %p106
    $region14: #{_lambda_.13} parent=5 // pred_check_branch
      %109 = sbr.rel (%p107) target = $region16
    $region15: #{_lambda_.13} parent=5 // pred_region
      // Predicated region
      $region17: #{_lambda_.13} parent=15 // pred_check
        %p110 = pneg %p43
      $region18: #{_lambda_.13} parent=15 // pred_check_branch
        %112 = sbr.rel (%p110) target = $region20
      $region19: #{_lambda_.13} parent=15 // pred_region
        %s113 = smul.u32 2, %s17
        %p114 = scmp.lt.s32.totalorder %s16, 1
        %s115 = scalar_select %p114, %s16, 1
        %p116 = scmp.lt.s32.totalorder %s113, 1
        %s117 = scalar_select %p116, %s113, 1
        %s118 = smul.addr %s115, 2
        %s119 = sadd.s32 %s117, %s118
        %s120 = smul.addr %s119, 4
        %s121 = scalar_lea.vmem %s0, %s120
        %s122 = smul.u32 2, %s17
      $region20: #{_lambda_.13} parent=15 // pred_fallthru
        _
    $region16: #{_lambda_.13} parent=5 // pred_fallthru
      _
    %p123 = scmp.le.s32.totalorder 1, %s9
    %p124 = scmp.lt.s32.totalorder %s9, 3
    %p125 = pnand %p123, %p124
    %p126 = pneg %p125
    // Predicated region
    $region21: #{_lambda_.13} parent=5 // pred_check
      _
    $region22: #{_lambda_.13} parent=5 // pred_check_branch
      %128 = sbr.rel (%p125) target = $region24
    $region23: #{_lambda_.13} parent=5 // pred_region
      %s129 = ssub.s32 %s9, 1
      %s130 = smul.u32 2, %s19
      %p131 = scmp.lt.s32.totalorder %s18, 1
      %s132 = scalar_select %p131, %s18, 1
      %p133 = scmp.lt.s32.totalorder %s130, 1
      %s134 = scalar_select %p133, %s130, 1
      %s135 = smul.addr %s132, 2
      %s136 = sadd.s32 %s134, %s135
      %s137 = smul.addr %s136, 4
      %s138 = scalar_lea.vmem %s0, %s137
      %p139 = pneg %p49
      %p140 = pneg %p46
      %p141 = pneg %p70
      %p142 = pneg %p67
      %p143 = pneg %p91
      %p144 = pneg %p88
      %s145 = smul.u32 2, %s19
      %p146 = scmp.lt.s32.totalorder %s18, 1
      %s147 = scalar_select %p146, %s18, 1
      %p148 = scmp.lt.s32.totalorder %s145, 1
      %s149 = scalar_select %p148, %s145, 1
      %s150 = smul.addr %s147, 2
      %s151 = sadd.s32 %s149, %s150
      %s152 = smul.addr %s151, 4
      %s153 = scalar_lea.vmem %s0, %s152
      %s154 = smul.u32 2, %s19
      %p155 = scmp.eq.s32.totalorder %s18, 0
      %p156 = scmp.eq.s32.totalorder %s19, 0
      %p157 = pnand %p155, %p156
      %p158 = pneg %p157
      // Predicated region
      $region25: #{_lambda_.13} parent=23 // pred_check
        _
      $region26: #{_lambda_.13} parent=23 // pred_check_branch
        %160 = sbr.rel (%p157) target = $region28
      $region27: #{_lambda_.13} parent=23 // pred_region
        %vm161 = vcmask 3072
        %162 = vst.msk [vmem:[%s1] sm:$0xf] %vm161, 0.0
        %163 = vst.msk [vmem:[%s2] sm:$0xf] %vm161, 0.0
      $region28: #{_lambda_.13} parent=23 // pred_fallthru
        _
      %v164 = vld [vmem:[%s153] sm:$0xff]
      %v165 = vld [vmem:[%s1] sm:$0xf]
      %v167 = vcombine.high %v164, %v164
      %vm169 = vcmask 1043456
      %v170 = vsel %vm169, %v164, 0.0
      %v171 = vsel %vm169, %v167, 0.0
      %v172 = vadd.f32 %v170, %v171
      %173 = vadd.xlane.f32.xlu0 %v172
      %v174 = vpop.xlane.xlu0 %173
      %v175 = vadd.f32 %v165, %v174
      %vm176 = vcmask 3072
      %177 = vst.msk [vmem:[%s1] sm:$0xf] %vm176, %v175
      %v178 = vld [vmem:[%s2] sm:$0xf]
      %v179 = vmul.f32 %v164, %v164
      %v181 = vcombine.high %v179, %v179
      %v183 = vsel %vm169, %v179, 0.0
      %v184 = vsel %vm169, %v181, 0.0
      %v185 = vadd.f32 %v183, %v184
      %186 = vadd.xlane.f32.xlu0 %v185
      %v187 = vpop.xlane.xlu0 %186
      %v188 = vadd.f32 %v178, %v187
      %189 = vst.msk [vmem:[%s2] sm:$0xf] %vm176, %v188
      // Predicated region
      $region29: #{_lambda_.13} parent=23 // pred_check
        %p190 = pneg %p67
      $region30: #{_lambda_.13} parent=23 // pred_check_branch
        %192 = sbr.rel (%p190) target = $region32
      $region31: #{_lambda_.13} parent=23 // pred_region
        _
      $region32: #{_lambda_.13} parent=23 // pred_fallthru
        _
      // Predicated region
      $region33: #{_lambda_.13} parent=23 // pred_check
        %p193 = pneg %p88
      $region34: #{_lambda_.13} parent=23 // pred_check_branch
        %195 = sbr.rel (%p193) target = $region36
      $region35: #{_lambda_.13} parent=23 // pred_region
        _
      $region36: #{_lambda_.13} parent=23 // pred_fallthru
        _
      // Predicated region
      $region37: #{_lambda_.13} parent=23 // pred_check
        %p196 = pneg %p67
      $region38: #{_lambda_.13} parent=23 // pred_check_branch
        %198 = sbr.rel (%p196) target = $region40
      $region39: #{_lambda_.13} parent=23 // pred_region
        _
      $region40: #{_lambda_.13} parent=23 // pred_fallthru
        _
      // Predicated region
      $region41: #{_lambda_.13} parent=23 // pred_check
        %p199 = pneg %p88
      $region42: #{_lambda_.13} parent=23 // pred_check_branch
        %201 = sbr.rel (%p199) target = $region44
      $region43: #{_lambda_.13} parent=23 // pred_region
        _
      $region44: #{_lambda_.13} parent=23 // pred_fallthru
        _
    $region24: #{_lambda_.13} parent=5 // pred_fallthru
      _
    %p202 = scmp.le.s32.totalorder 2, %s9
    // Predicated region
    $region45: #{_lambda_.13} parent=5 // pred_check
      %p203 = pneg %p202
    $region46: #{_lambda_.13} parent=5 // pred_check_branch
      %205 = sbr.rel (%p203) target = $region48
    $region47: #{_lambda_.13} parent=5 // pred_region
      %s206 = ssub.s32 %s9, 2
    $region48: #{_lambda_.13} parent=5 // pred_fallthru
      _
  $region6: #{_lambda_.13} parent=0 // loop_footer
    %s13 = sadd.s32 1, %s9
  $region7: #{_lambda_.13} parent=0 // loop_footer_branch
    %8 = sbr.rel target = $region3
  $region8: #{_lambda_.13} parent=0 // loop_exit
    _

// kernel: _lambda_.14
$region0: #{_lambda_.14}
  #allocation0 [shape = 'u32[]', space=smem, size = 0x4, offset = 0x4, fixed_abs, tag = 'smem constant byte address 0x4 - core index']
  #allocation1 [shape = 'u32[144,128]{1,0:T(1,128)}', space=vmem, size = 0x12000, scoped, tag = 'internal scratch']
  %s0 = inlined_call_operand.vmem [shape: f32[2,4,256], index: 0, kind: input, shape index: {}, may-alias: {0,4}]
  %s1 = inlined_call_operand.vmem [shape: f32[4,1], index: 1, kind: input, shape index: {}]
  %s2 = inlined_call_operand.vmem [shape: f32[4,1], index: 2, kind: input, shape index: {}]
  %s3 = inlined_call_operand.vmem [shape: f32[4,1], index: 3, kind: input, shape index: {}]
  %s4 = inlined_call_operand.vmem [shape: f32[2,4,256], index: 4, kind: output, shape index: {}, may-alias: {0,4}]
  %s5 = sld [smem:[#allocation0]]
  $region49: #{_lambda_.14} parent=0
    _
  %s7 = ssub.s32 1, %s5
  %s8 = scalar_select 0, %s7, %s5
  loop: start=0, step=1, limit=4
  $region2: #{_lambda_.14} parent=0 // loop_pre_header
    _
  $region3: #{_lambda_.14} parent=0 // loop_header
    %s10 = sphi 0, %s14
    %p11 = scmp.ge.s32.totalorder %s10, 4
    %s17 = sphi 0, %s29
    %s18 = sphi 0, %s25
    %s19 = sphi 0, %s17
    %s20 = sphi 0, %s18
    %s21 = sphi 0, %s19
    %s22 = sphi 0, %s20
    %s34 = sphi 0, %s36
    %s37 = sphi 0, %s34
    %s38 = sphi 0, %s37
    %s54 = sphi 0, %s38
    %s58 = sphi 0, %s58
    %s60 = sphi 0, %s58
    %s61 = sphi 0, %s60
    %s75 = sphi 0, %s61
    %s79 = sphi 0, %s79
    %s81 = sphi 0, %s79
    %s82 = sphi 0, %s81
    %s96 = sphi 0, %s82
    %s100 = sphi 0, %s100
    %s102 = sphi 0, %s100
    %s103 = sphi 0, %s102
    %s117 = sphi 0, %s103
    %s125 = sphi 0, %s127
    %s128 = sphi 0, %s125
    %s129 = sphi 0, %s128
    %s145 = sphi 0, %s129
  $region4: #{_lambda_.14} parent=0 // loop_header_branch
    %13 = sbr.rel (%p11) target = $region8
  $region5: #{_lambda_.14} parent=0 // loop_body
    %s15 = ssub.s32 %s10, 1
    %s16 = ssub.s32 %s10, 2
    %s23 = sadd.s32 1, %s18
    %p24 = scmp.ge.s32.totalorder %s23, 1
    %s25 = scalar_select %p24, 0, %s23
    %s26 = sadd.s32 1, %s17
    %s27 = scalar_select %p24, %s26, %s17
    %p28 = scmp.ge.s32.totalorder %s27, 2
    %s29 = scalar_select %p28, 0, %s27
    %s30 = ssub.s32 %s17, %s29
    %s31 = ssub.s32 %s18, %s25
    %s32 = sor.u32 %s30, %s31
    %p33 = scmp.eq.s32.totalorder %s32, 0
    %s35 = sadd.s32 %s34, 1
    %s36 = scalar_select %p33, %s34, %s35
    %p39 = pneg %p33
    %p40 = scmp.eq.s32.totalorder %s10, 1
    %p41 = por %p39, %p40
    %p42 = scmp.ne.s32.totalorder %s34, %s37
    %p43 = scmp.eq.s32.totalorder %s10, 0
    %p44 = por %p42, %p43
    %p45 = scmp.ne.s32.totalorder %s34, %s37
    %p46 = scmp.eq.s32.totalorder %s15, 1
    %p47 = por %p45, %p46
    %p48 = scmp.ne.s32.totalorder %s37, %s38
    %p49 = scmp.eq.s32.totalorder %s15, 0
    %p50 = por %p48, %p49
    %p51 = scmp.ne.s32.totalorder %s37, %s38
    %p52 = scmp.eq.s32.totalorder %s16, 1
    %p53 = por %p51, %p52
    %p55 = scmp.ne.s32.totalorder %s38, %s54
    %p56 = scmp.eq.s32.totalorder %s16, 0
    %p57 = por %p55, %p56
    %s59 = sadd.s32 %s58, 1
    %p62 = scmp.eq.s32.totalorder %s10, 1
    %p63 = scmp.ne.s32.totalorder %s58, %s60
    %p64 = scmp.eq.s32.totalorder %s10, 0
    %p65 = por %p63, %p64
    %p66 = scmp.ne.s32.totalorder %s58, %s60
    %p67 = scmp.eq.s32.totalorder %s15, 1
    %p68 = por %p66, %p67
    %p69 = scmp.ne.s32.totalorder %s60, %s61
    %p70 = scmp.eq.s32.totalorder %s15, 0
    %p71 = por %p69, %p70
    %p72 = scmp.ne.s32.totalorder %s60, %s61
    %p73 = scmp.eq.s32.totalorder %s16, 1
    %p74 = por %p72, %p73
    %p76 = scmp.ne.s32.totalorder %s61, %s75
    %p77 = scmp.eq.s32.totalorder %s16, 0
    %p78 = por %p76, %p77
    %s80 = sadd.s32 %s79, 1
    %p83 = scmp.eq.s32.totalorder %s10, 1
    %p84 = scmp.ne.s32.totalorder %s79, %s81
    %p85 = scmp.eq.s32.totalorder %s10, 0
    %p86 = por %p84, %p85
    %p87 = scmp.ne.s32.totalorder %s79, %s81
    %p88 = scmp.eq.s32.totalorder %s15, 1
    %p89 = por %p87, %p88
    %p90 = scmp.ne.s32.totalorder %s81, %s82
    %p91 = scmp.eq.s32.totalorder %s15, 0
    %p92 = por %p90, %p91
    %p93 = scmp.ne.s32.totalorder %s81, %s82
    %p94 = scmp.eq.s32.totalorder %s16, 1
    %p95 = por %p93, %p94
    %p97 = scmp.ne.s32.totalorder %s82, %s96
    %p98 = scmp.eq.s32.totalorder %s16, 0
    %p99 = por %p97, %p98
    %s101 = sadd.s32 %s100, 1
    %p104 = scmp.eq.s32.totalorder %s10, 1
    %p105 = scmp.ne.s32.totalorder %s100, %s102
    %p106 = scmp.eq.s32.totalorder %s10, 0
    %p107 = por %p105, %p106
    %p108 = scmp.ne.s32.totalorder %s100, %s102
    %p109 = scmp.eq.s32.totalorder %s15, 1
    %p110 = por %p108, %p109
    %p111 = scmp.ne.s32.totalorder %s102, %s103
    %p112 = scmp.eq.s32.totalorder %s15, 0
    %p113 = por %p111, %p112
    %p114 = scmp.ne.s32.totalorder %s102, %s103
    %p115 = scmp.eq.s32.totalorder %s16, 1
    %p116 = por %p114, %p115
    %p118 = scmp.ne.s32.totalorder %s103, %s117
    %p119 = scmp.eq.s32.totalorder %s16, 0
    %p120 = por %p118, %p119
    %s121 = ssub.s32 %s17, %s29
    %s122 = ssub.s32 %s18, %s25
    %s123 = sor.u32 %s121, %s122
    %p124 = scmp.eq.s32.totalorder %s123, 0
    %s126 = sadd.s32 %s125, 1
    %s127 = scalar_select %p124, %s125, %s126
    %p130 = pneg %p124
    %p131 = scmp.eq.s32.totalorder %s10, 1
    %p132 = por %p130, %p131
    %p133 = scmp.ne.s32.totalorder %s125, %s128
    %p134 = scmp.eq.s32.totalorder %s10, 0
    %p135 = por %p133, %p134
    %p136 = scmp.ne.s32.totalorder %s125, %s128
    %p137 = scmp.eq.s32.totalorder %s15, 1
    %p138 = por %p136, %p137
    %p139 = scmp.ne.s32.totalorder %s128, %s129
    %p140 = scmp.eq.s32.totalorder %s15, 0
    %p141 = por %p139, %p140
    %p142 = scmp.ne.s32.totalorder %s128, %s129
    %p143 = scmp.eq.s32.totalorder %s16, 1
    %p144 = por %p142, %p143
    %p146 = scmp.ne.s32.totalorder %s129, %s145
    %p147 = scmp.eq.s32.totalorder %s16, 0
    %p148 = por %p146, %p147
    %p149 = scmp.le.s32.totalorder 1, %s10
    %p150 = scmp.lt.s32.totalorder %s10, 3
    %p151 = pnand %p149, %p150
    %p152 = pneg %p151
    // Predicated region
    $region9: #{_lambda_.14} parent=5 // pred_check
      _
    $region10: #{_lambda_.14} parent=5 // pred_check_branch
      %154 = sbr.rel (%p151) target = $region12
    $region11: #{_lambda_.14} parent=5 // pred_region
      %s155 = ssub.s32 %s10, 1
      // Predicated region
      $region13: #{_lambda_.14} parent=11 // pred_check
        %p156 = pneg %p71
      $region14: #{_lambda_.14} parent=11 // pred_check_branch
        %158 = sbr.rel (%p156) target = $region16
      $region15: #{_lambda_.14} parent=11 // pred_region
        _
      $region16: #{_lambda_.14} parent=11 // pred_fallthru
        _
      // Predicated region
      $region17: #{_lambda_.14} parent=11 // pred_check
        %p159 = pneg %p92
      $region18: #{_lambda_.14} parent=11 // pred_check_branch
        %161 = sbr.rel (%p159) target = $region20
      $region19: #{_lambda_.14} parent=11 // pred_region
        _
      $region20: #{_lambda_.14} parent=11 // pred_fallthru
        _
      // Predicated region
      $region21: #{_lambda_.14} parent=11 // pred_check
        %p162 = pneg %p113
      $region22: #{_lambda_.14} parent=11 // pred_check_branch
        %164 = sbr.rel (%p162) target = $region24
      $region23: #{_lambda_.14} parent=11 // pred_region
        _
      $region24: #{_lambda_.14} parent=11 // pred_fallthru
        _
    $region12: #{_lambda_.14} parent=5 // pred_fallthru
      _
    %p165 = scmp.lt.s32.totalorder %s10, 2
    // Predicated region
    $region25: #{_lambda_.14} parent=5 // pred_check
      %p166 = pneg %p165
    $region26: #{_lambda_.14} parent=5 // pred_check_branch
      %168 = sbr.rel (%p166) target = $region28
    $region27: #{_lambda_.14} parent=5 // pred_region
      // Predicated region
      $region29: #{_lambda_.14} parent=27 // pred_check
        %p169 = pneg %p44
      $region30: #{_lambda_.14} parent=27 // pred_check_branch
        %171 = sbr.rel (%p169) target = $region32
      $region31: #{_lambda_.14} parent=27 // pred_region
        %s172 = smul.u32 2, %s18
        %p173 = scmp.lt.s32.totalorder %s17, 1
        %s174 = scalar_select %p173, %s17, 1
        %p175 = scmp.lt.s32.totalorder %s172, 1
        %s176 = scalar_select %p175, %s172, 1
        %s177 = smul.addr %s174, 2
        %s178 = sadd.s32 %s176, %s177
        %s179 = smul.addr %s178, 4
        %s180 = scalar_lea.vmem %s0, %s179
        %s181 = smul.u32 2, %s18
      $region32: #{_lambda_.14} parent=27 // pred_fallthru
        _
    $region28: #{_lambda_.14} parent=5 // pred_fallthru
      _
    %p182 = scmp.le.s32.totalorder 1, %s10
    %p183 = scmp.lt.s32.totalorder %s10, 3
    %p184 = pnand %p182, %p183
    %p185 = pneg %p184
    // Predicated region
    $region33: #{_lambda_.14} parent=5 // pred_check
      _
    $region34: #{_lambda_.14} parent=5 // pred_check_branch
      %187 = sbr.rel (%p184) target = $region36
    $region35: #{_lambda_.14} parent=5 // pred_region
      %s188 = ssub.s32 %s10, 1
      %s189 = smul.u32 2, %s20
      %p190 = scmp.lt.s32.totalorder %s19, 1
      %s191 = scalar_select %p190, %s19, 1
      %p192 = scmp.lt.s32.totalorder %s189, 1
      %s193 = scalar_select %p192, %s189, 1
      %s194 = smul.addr %s191, 2
      %s195 = sadd.s32 %s193, %s194
      %s196 = smul.addr %s195, 4
      %s197 = scalar_lea.vmem %s0, %s196
      %p198 = pneg %p50
      %p199 = pneg %p47
      %p200 = pneg %p71
      %p201 = pneg %p68
      %p202 = pneg %p92
      %p203 = pneg %p89
      %p204 = pneg %p113
      %p205 = pneg %p110
      %p206 = pneg %p141
      %p207 = pneg %p138
      %s208 = smul.u32 2, %s20
      %p209 = scmp.lt.s32.totalorder %s19, 1
      %s210 = scalar_select %p209, %s19, 1
      %p211 = scmp.lt.s32.totalorder %s208, 1
      %s212 = scalar_select %p211, %s208, 1
      %s213 = smul.addr %s210, 2
      %s214 = sadd.s32 %s212, %s213
      %s215 = smul.addr %s214, 4
      %s216 = scalar_lea.vmem %s4, %s215
      %s217 = smul.u32 2, %s20
      %p218 = scmp.lt.s32.totalorder %s19, 1
      %s219 = scalar_select %p218, %s19, 1
      %p220 = scmp.lt.s32.totalorder %s217, 1
      %s221 = scalar_select %p220, %s217, 1
      %s222 = smul.addr %s219, 2
      %s223 = sadd.s32 %s221, %s222
      %s224 = smul.addr %s223, 4
      %s225 = scalar_lea.vmem %s0, %s224
      %s226 = smul.u32 2, %s20
      %s227 = smul.u32 2, %s20
      %p228 = scmp.lt.s32.totalorder %s19, 1
      %s229 = scalar_select %p228, %s19, 1
      %p230 = scmp.lt.s32.totalorder %s227, 1
      %s231 = scalar_select %p230, %s227, 1
      %s232 = smul.addr %s229, 2
      %s233 = sadd.s32 %s231, %s232
      %s234 = smul.addr %s233, 4
      %s235 = scalar_lea.vmem %s4, %s234
      %s236 = smul.u32 2, %s20
      %v237 = vld [vmem:[%s225] sm:$0xff]
      %v238 = vld [vmem:[%s1] sm:$0xf]
      %240 = vset.pattern.permute.xlu0 0
      %241 = vperm.xlu0 %240, %v238
      %v242 = vpop.permute.xlu0 %241
      %v244 = vunpack.c.l.s4 839922192
      %v245 = vunpack.c.0.s8 %v244
      %v246 = vlaneseq
      %v247 = vshrl.u32 %v246, 7
      %v248 = vsub.s32 %v245, %v247
      %v249 = vrot.slane %v242, %v248
      %v251 = vmul.f32 %v237, %v249
      %v252 = vld [vmem:[%s2] sm:$0xf]
      %254 = vset.pattern.permute.xlu0 0
      %255 = vperm.xlu0 %254, %v252
      %v256 = vpop.permute.xlu0 %255
      %v258 = vunpack.c.l.s4 839922192
      %v259 = vunpack.c.0.s8 %v258
      %v260 = vlaneseq
      %v261 = vshrl.u32 %v260, 7
      %v262 = vsub.s32 %v259, %v261
      %v263 = vrot.slane %v256, %v262
      %v265 = vadd.f32 %v251, %v263
      %vm266 = vcmp.gt.f32.partialorder %v265, 0.0
      %v267 = vld [vmem:[%s3] sm:$0xf]
      %269 = vset.pattern.permute.xlu0 0
      %270 = vperm.xlu0 %269, %v267
      %v271 = vpop.permute.xlu0 %270
      %v274 = vcombine.high %v265, %v265
      %v276 = vmul.f32 %v271, %v265
      %v277 = vmul.f32 %v271, %v274
      %v280 = vcombine.low %v276, %v277
      %v282 = vsel %vm266, %v265, %v280
      %283 = vst [vmem:[%s235] sm:$0xff] %v282
      %s284 = smul.u32 2, %s20
      %p285 = scmp.lt.s32.totalorder %s19, 1
      %s286 = scalar_select %p285, %s19, 1
      %p287 = scmp.lt.s32.totalorder %s284, 1
      %s288 = scalar_select %p287, %s284, 1
      %s289 = smul.addr %s286, 2
      %s290 = sadd.s32 %s288, %s289
      %s291 = smul.addr %s290, 4
      %s292 = scalar_lea.vmem %s4, %s291
      // Predicated region
      $region37: #{_lambda_.14} parent=35 // pred_check
        %p293 = pneg %p138
      $region38: #{_lambda_.14} parent=35 // pred_check_branch
        %295 = sbr.rel (%p293) target = $region40
      $region39: #{_lambda_.14} parent=35 // pred_region
        %s296 = smul.u32 2, %s20
      $region40: #{_lambda_.14} parent=35 // pred_fallthru
        _
    $region36: #{_lambda_.14} parent=5 // pred_fallthru
      _
    %p297 = scmp.le.s32.totalorder 2, %s10
    // Predicated region
    $region41: #{_lambda_.14} parent=5 // pred_check
      %p298 = pneg %p297
    $region42: #{_lambda_.14} parent=5 // pred_check_branch
      %300 = sbr.rel (%p298) target = $region44
    $region43: #{_lambda_.14} parent=5 // pred_region
      %s301 = ssub.s32 %s10, 2
      // Predicated region
      $region45: #{_lambda_.14} parent=43 // pred_check
        %p302 = pneg %p144
      $region46: #{_lambda_.14} parent=43 // pred_check_branch
        %304 = sbr.rel (%p302) target = $region48
      $region47: #{_lambda_.14} parent=43 // pred_region
        %s305 = smul.u32 2, %s22
        %p306 = scmp.lt.s32.totalorder %s21, 1
        %s307 = scalar_select %p306, %s21, 1
        %p308 = scmp.lt.s32.totalorder %s305, 1
        %s309 = scalar_select %p308, %s305, 1
        %s310 = smul.addr %s307, 2
        %s311 = sadd.s32 %s309, %s310
        %s312 = smul.addr %s311, 4
        %s313 = scalar_lea.vmem %s4, %s312
      $region48: #{_lambda_.14} parent=43 // pred_fallthru
        _
    $region44: #{_lambda_.14} parent=5 // pred_fallthru
      _
  $region6: #{_lambda_.14} parent=0 // loop_footer
    %s14 = sadd.s32 1, %s10
  $region7: #{_lambda_.14} parent=0 // loop_footer_branch
    %9 = sbr.rel target = $region3
  $region8: #{_lambda_.14} parent=0 // loop_exit
    _

// kernel: _lambda_.17
$region0: #{_lambda_.17}
  #allocation0 [shape = 'u32[]', space=smem, size = 0x4, offset = 0x4, fixed_abs, tag = 'smem constant byte address 0x4 - core index']
  #allocation1 [shape = 'u32[144,128]{1,0:T(1,128)}', space=vmem, size = 0x12000, scoped, tag = 'internal scratch']
  %s0 = inlined_call_operand.vmem [shape: f32[2,2,256], index: 0, kind: input, shape index: {}]
  %s1 = inlined_call_operand.vmem [shape: f32[2,1], index: 1, kind: output, shape index: {0}]
  %s2 = inlined_call_operand.vmem [shape: f32[2,1], index: 2, kind: output, shape index: {1}]
  %3 = xla_tuple %s1, %s2
  %s4 = sld [smem:[#allocation0]]
  $region49: #{_lambda_.17} parent=0
    _
  %s6 = ssub.s32 1, %s4
  %s7 = scalar_select 0, %s6, %s4
  loop: start=0, step=1, limit=4
  $region2: #{_lambda_.17} parent=0 // loop_pre_header
    _
  $region3: #{_lambda_.17} parent=0 // loop_header
    %s9 = sphi 0, %s13
    %p10 = scmp.ge.s32.totalorder %s9, 4
    %s16 = sphi 0, %s28
    %s17 = sphi 0, %s24
    %s18 = sphi 0, %s16
    %s19 = sphi 0, %s17
    %s20 = sphi 0, %s18
    %s21 = sphi 0, %s19
    %s33 = sphi 0, %s35
    %s36 = sphi 0, %s33
    %s37 = sphi 0, %s36
    %s53 = sphi 0, %s37
    %s57 = sphi 0, %s57
    %s59 = sphi 0, %s57
    %s60 = sphi 0, %s59
    %s74 = sphi 0, %s60
    %s78 = sphi 0, %s78
    %s80 = sphi 0, %s78
    %s81 = sphi 0, %s80
    %s95 = sphi 0, %s81
  $region4: #{_lambda_.17} parent=0 // loop_header_branch
    %12 = sbr.rel (%p10) target = $region8
  $region5: #{_lambda_.17} parent=0 // loop_body
    %s14 = ssub.s32 %s9, 1
    %s15 = ssub.s32 %s9, 2
    %s22 = sadd.s32 1, %s17
    %p23 = scmp.ge.s32.totalorder %s22, 1
    %s24 = scalar_select %p23, 0, %s22
    %s25 = sadd.s32 1, %s16
    %s26 = scalar_select %p23, %s25, %s16
    %p27 = scmp.ge.s32.totalorder %s26, 2
    %s28 = scalar_select %p27, 0, %s26
    %s29 = ssub.s32 %s16, %s28
    %s30 = ssub.s32 %s17, %s24
    %s31 = sor.u32 %s29, %s30
    %p32 = scmp.eq.s32.totalorder %s31, 0
    %s34 = sadd.s32 %s33, 1
    %s35 = scalar_select %p32, %s33, %s34
    %p38 = pneg %p32
    %p39 = scmp.eq.s32.totalorder %s9, 1
    %p40 = por %p38, %p39
    %p41 = scmp.ne.s32.totalorder %s33, %s36
    %p42 = scmp.eq.s32.totalorder %s9, 0
    %p43 = por %p41, %p42
    %p44 = scmp.ne.s32.totalorder %s33, %s36
    %p45 = scmp.eq.s32.totalorder %s14, 1
    %p46 = por %p44, %p45
    %p47 = scmp.ne.s32.totalorder %s36, %s37
    %p48 = scmp.eq.s32.totalorder %s14, 0
    %p49 = por %p47, %p48
    %p50 = scmp.ne.s32.totalorder %s36, %s37
    %p51 = scmp.eq.s32.totalorder %s15, 1
    %p52 = por %p50, %p51
    %p54 = scmp.ne.s32.totalorder %s37, %s53
    %p55 = scmp.eq.s32.totalorder %s15, 0
    %p56 = por %p54, %p55
    %s58 = sadd.s32 %s57, 1
    %p61 = scmp.eq.s32.totalorder %s9, 1
    %p62 = scmp.ne.s32.totalorder %s57, %s59
    %p63 = scmp.eq.s32.totalorder %s9, 0
    %p64 = por %p62, %p63
    %p65 = scmp.ne.s32.totalorder %s57, %s59
    %p66 = scmp.eq.s32.totalorder %s14, 1
    %p67 = por %p65, %p66
    %p68 = scmp.ne.s32.totalorder %s59, %s60
    %p69 = scmp.eq.s32.totalorder %s14, 0
    %p70 = por %p68, %p69
    %p71 = scmp.ne.s32.totalorder %s59, %s60
    %p72 = scmp.eq.s32.totalorder %s15, 1
    %p73 = por %p71, %p72
    %p75 = scmp.ne.s32.totalorder %s60, %s74
    %p76 = scmp.eq.s32.totalorder %s15, 0
    %p77 = por %p75, %p76
    %s79 = sadd.s32 %s78, 1
    %p82 = scmp.eq.s32.totalorder %s9, 1
    %p83 = scmp.ne.s32.totalorder %s78, %s80
    %p84 = scmp.eq.s32.totalorder %s9, 0
    %p85 = por %p83, %p84
    %p86 = scmp.ne.s32.totalorder %s78, %s80
    %p87 = scmp.eq.s32.totalorder %s14, 1
    %p88 = por %p86, %p87
    %p89 = scmp.ne.s32.totalorder %s80, %s81
    %p90 = scmp.eq.s32.totalorder %s14, 0
    %p91 = por %p89, %p90
    %p92 = scmp.ne.s32.totalorder %s80, %s81
    %p93 = scmp.eq.s32.totalorder %s15, 1
    %p94 = por %p92, %p93
    %p96 = scmp.ne.s32.totalorder %s81, %s95
    %p97 = scmp.eq.s32.totalorder %s15, 0
    %p98 = por %p96, %p97
    %p99 = scmp.le.s32.totalorder 1, %s9
    %p100 = scmp.lt.s32.totalorder %s9, 3
    %p101 = pnand %p99, %p100
    %p102 = pneg %p101
    // Predicated region
    $region9: #{_lambda_.17} parent=5 // pred_check
      _
    $region10: #{_lambda_.17} parent=5 // pred_check_branch
      %104 = sbr.rel (%p101) target = $region12
    $region11: #{_lambda_.17} parent=5 // pred_region
      %s105 = ssub.s32 %s9, 1
    $region12: #{_lambda_.17} parent=5 // pred_fallthru
      _
    %p106 = scmp.lt.s32.totalorder %s9, 2
    // Predicated region
    $region13: #{_lambda_.17} parent=5 // pred_check
      %p107 = pneg %p106
    $region14: #{_lambda_.17} parent=5 // pred_check_branch
      %109 = sbr.rel (%p107) target = $region16
    $region15: #{_lambda_.17} parent=5 // pred_region
      // Predicated region
      $region17: #{_lambda_.17} parent=15 // pred_check
        %p110 = pneg %p43
      $region18: #{_lambda_.17} parent=15 // pred_check_branch
        %112 = sbr.rel (%p110) target = $region20
      $region19: #{_lambda_.17} parent=15 // pred_region
        %s113 = smul.u32 2, %s17
        %p114 = scmp.lt.s32.totalorder %s16, 1
        %s115 = scalar_select %p114, %s16, 1
        %p116 = scmp.lt.s32.totalorder %s113, 1
        %s117 = scalar_select %p116, %s113, 1
        %s118 = smul.addr %s115, 2
        %s119 = sadd.s32 %s117, %s118
        %s120 = smul.addr %s119, 2
        %s121 = scalar_lea.vmem %s0, %s120
        %s122 = smul.u32 2, %s17
      $region20: #{_lambda_.17} parent=15 // pred_fallthru
        _
    $region16: #{_lambda_.17} parent=5 // pred_fallthru
      _
    %p123 = scmp.le.s32.totalorder 1, %s9
    %p124 = scmp.lt.s32.totalorder %s9, 3
    %p125 = pnand %p123, %p124
    %p126 = pneg %p125
    // Predicated region
    $region21: #{_lambda_.17} parent=5 // pred_check
      _
    $region22: #{_lambda_.17} parent=5 // pred_check_branch
      %128 = sbr.rel (%p125) target = $region24
    $region23: #{_lambda_.17} parent=5 // pred_region
      %s129 = ssub.s32 %s9, 1
      %s130 = smul.u32 2, %s19
      %p131 = scmp.lt.s32.totalorder %s18, 1
      %s132 = scalar_select %p131, %s18, 1
      %p133 = scmp.lt.s32.totalorder %s130, 1
      %s134 = scalar_select %p133, %s130, 1
      %s135 = smul.addr %s132, 2
      %s136 = sadd.s32 %s134, %s135
      %s137 = smul.addr %s136, 2
      %s138 = scalar_lea.vmem %s0, %s137
      %p139 = pneg %p49
      %p140 = pneg %p46
      %p141 = pneg %p70
      %p142 = pneg %p67
      %p143 = pneg %p91
      %p144 = pneg %p88
      %s145 = smul.u32 2, %s19
      %p146 = scmp.lt.s32.totalorder %s18, 1
      %s147 = scalar_select %p146, %s18, 1
      %p148 = scmp.lt.s32.totalorder %s145, 1
      %s149 = scalar_select %p148, %s145, 1
      %s150 = smul.addr %s147, 2
      %s151 = sadd.s32 %s149, %s150
      %s152 = smul.addr %s151, 2
      %s153 = scalar_lea.vmem %s0, %s152
      %s154 = smul.u32 2, %s19
      %p155 = scmp.eq.s32.totalorder %s18, 0
      %p156 = scmp.eq.s32.totalorder %s19, 0
      %p157 = pnand %p155, %p156
      %p158 = pneg %p157
      // Predicated region
      $region25: #{_lambda_.17} parent=23 // pred_check
        _
      $region26: #{_lambda_.17} parent=23 // pred_check_branch
        %160 = sbr.rel (%p157) target = $region28
      $region27: #{_lambda_.17} parent=23 // pred_region
        %vm161 = vcmask 1024
        %162 = vst.msk [vmem:[%s1] sm:$0x3] %vm161, 0.0
        %163 = vst.msk [vmem:[%s2] sm:$0x3] %vm161, 0.0
      $region28: #{_lambda_.17} parent=23 // pred_fallthru
        _
      %v164 = vld [vmem:[%s153] sm:$0xf]
      %v165 = vld [vmem:[%s1] sm:$0x3]
      %v168 = vunpack.c.l.s4 1983009808
      %v169 = vunpack.c.0.s8 %v168
      %v170 = vlaneseq
      %v171 = vshrl.u32 %v170, 7
      %v172 = vsub.s32 %v169, %v171
      %v173 = vrot.slane %v164, %v172
      %v174 = vcombine.high %v173, %v173
      %vm177 = vcmask 1041408
      %v178 = vsel %vm177, %v173, 0.0
      %v179 = vsel %vm177, %v174, 0.0
      %v180 = vadd.f32 %v178, %v179
      %181 = vadd.xlane.f32.xlu0 %v180
      %v182 = vpop.xlane.xlu0 %181
      %v183 = vadd.f32 %v165, %v182
      %vm184 = vcmask 1024
      %185 = vst.msk [vmem:[%s1] sm:$0x3] %vm184, %v183
      %v186 = vld [vmem:[%s2] sm:$0x3]
      %v187 = vmul.f32 %v164, %v164
      %v190 = vunpack.c.l.s4 1983009808
      %v191 = vunpack.c.0.s8 %v190
      %v192 = vlaneseq
      %v193 = vshrl.u32 %v192, 7
      %v194 = vsub.s32 %v191, %v193
      %v195 = vrot.slane %v187, %v194
      %v196 = vcombine.high %v195, %v195
      %v199 = vsel %vm177, %v195, 0.0
      %v200 = vsel %vm177, %v196, 0.0
      %v201 = vadd.f32 %v199, %v200
      %202 = vadd.xlane.f32.xlu0 %v201
      %v203 = vpop.xlane.xlu0 %202
      %v204 = vadd.f32 %v186, %v203
      %205 = vst.msk [vmem:[%s2] sm:$0x3] %vm184, %v204
      // Predicated region
      $region29: #{_lambda_.17} parent=23 // pred_check
        %p206 = pneg %p67
      $region30: #{_lambda_.17} parent=23 // pred_check_branch
        %208 = sbr.rel (%p206) target = $region32
      $region31: #{_lambda_.17} parent=23 // pred_region
        _
      $region32: #{_lambda_.17} parent=23 // pred_fallthru
        _
      // Predicated region
      $region33: #{_lambda_.17} parent=23 // pred_check
        %p209 = pneg %p88
      $region34: #{_lambda_.17} parent=23 // pred_check_branch
        %211 = sbr.rel (%p209) target = $region36
      $region35: #{_lambda_.17} parent=23 // pred_region
        _
      $region36: #{_lambda_.17} parent=23 // pred_fallthru
        _
      // Predicated region
      $region37: #{_lambda_.17} parent=23 // pred_check
        %p212 = pneg %p67
      $region38: #{_lambda_.17} parent=23 // pred_check_branch
        %214 = sbr.rel (%p212) target = $region40
      $region39: #{_lambda_.17} parent=23 // pred_region
        _
      $region40: #{_lambda_.17} parent=23 // pred_fallthru
        _
      // Predicated region
      $region41: #{_lambda_.17} parent=23 // pred_check
        %p215 = pneg %p88
      $region42: #{_lambda_.17} parent=23 // pred_check_branch
        %217 = sbr.rel (%p215) target = $region44
      $region43: #{_lambda_.17} parent=23 // pred_region
        _
      $region44: #{_lambda_.17} parent=23 // pred_fallthru
        _
    $region24: #{_lambda_.17} parent=5 // pred_fallthru
      _
    %p218 = scmp.le.s32.totalorder 2, %s9
    // Predicated region
    $region45: #{_lambda_.17} parent=5 // pred_check
      %p219 = pneg %p218
    $region46: #{_lambda_.17} parent=5 // pred_check_branch
      %221 = sbr.rel (%p219) target = $region48
    $region47: #{_lambda_.17} parent=5 // pred_region
      %s222 = ssub.s32 %s9, 2
    $region48: #{_lambda_.17} parent=5 // pred_fallthru
      _
  $region6: #{_lambda_.17} parent=0 // loop_footer
    %s13 = sadd.s32 1, %s9
  $region7: #{_lambda_.17} parent=0 // loop_footer_branch
    %8 = sbr.rel target = $region3
  $region8: #{_lambda_.17} parent=0 // loop_exit
    _

// kernel: _lambda_.18
$region0: #{_lambda_.18}
  #allocation0 [shape = 'u32[]', space=smem, size = 0x4, offset = 0x4, fixed_abs, tag = 'smem constant byte address 0x4 - core index']
  #allocation1 [shape = 'u32[144,128]{1,0:T(1,128)}', space=vmem, size = 0x12000, scoped, tag = 'internal scratch']
  %s0 = inlined_call_operand.vmem [shape: f32[2,2,256], index: 0, kind: input, shape index: {}, may-alias: {0,4}]
  %s1 = inlined_call_operand.vmem [shape: f32[2,1], index: 1, kind: input, shape index: {}]
  %s2 = inlined_call_operand.vmem [shape: f32[2,1], index: 2, kind: input, shape index: {}]
  %s3 = inlined_call_operand.vmem [shape: f32[2,1], index: 3, kind: input, shape index: {}]
  %s4 = inlined_call_operand.vmem [shape: f32[2,2,256], index: 4, kind: output, shape index: {}, may-alias: {0,4}]
  %s5 = sld [smem:[#allocation0]]
  $region49: #{_lambda_.18} parent=0
    _
  %s7 = ssub.s32 1, %s5
  %s8 = scalar_select 0, %s7, %s5
  loop: start=0, step=1, limit=4
  $region2: #{_lambda_.18} parent=0 // loop_pre_header
    _
  $region3: #{_lambda_.18} parent=0 // loop_header
    %s10 = sphi 0, %s14
    %p11 = scmp.ge.s32.totalorder %s10, 4
    %s17 = sphi 0, %s29
    %s18 = sphi 0, %s25
    %s19 = sphi 0, %s17
    %s20 = sphi 0, %s18
    %s21 = sphi 0, %s19
    %s22 = sphi 0, %s20
    %s34 = sphi 0, %s36
    %s37 = sphi 0, %s34
    %s38 = sphi 0, %s37
    %s54 = sphi 0, %s38
    %s58 = sphi 0, %s58
    %s60 = sphi 0, %s58
    %s61 = sphi 0, %s60
    %s75 = sphi 0, %s61
    %s79 = sphi 0, %s79
    %s81 = sphi 0, %s79
    %s82 = sphi 0, %s81
    %s96 = sphi 0, %s82
    %s100 = sphi 0, %s100
    %s102 = sphi 0, %s100
    %s103 = sphi 0, %s102
    %s117 = sphi 0, %s103
    %s125 = sphi 0, %s127
    %s128 = sphi 0, %s125
    %s129 = sphi 0, %s128
    %s145 = sphi 0, %s129
  $region4: #{_lambda_.18} parent=0 // loop_header_branch
    %13 = sbr.rel (%p11) target = $region8
  $region5: #{_lambda_.18} parent=0 // loop_body
    %s15 = ssub.s32 %s10, 1
    %s16 = ssub.s32 %s10, 2
    %s23 = sadd.s32 1, %s18
    %p24 = scmp.ge.s32.totalorder %s23, 1
    %s25 = scalar_select %p24, 0, %s23
    %s26 = sadd.s32 1, %s17
    %s27 = scalar_select %p24, %s26, %s17
    %p28 = scmp.ge.s32.totalorder %s27, 2
    %s29 = scalar_select %p28, 0, %s27
    %s30 = ssub.s32 %s17, %s29
    %s31 = ssub.s32 %s18, %s25
    %s32 = sor.u32 %s30, %s31
    %p33 = scmp.eq.s32.totalorder %s32, 0
    %s35 = sadd.s32 %s34, 1
    %s36 = scalar_select %p33, %s34, %s35
    %p39 = pneg %p33
    %p40 = scmp.eq.s32.totalorder %s10, 1
    %p41 = por %p39, %p40
    %p42 = scmp.ne.s32.totalorder %s34, %s37
    %p43 = scmp.eq.s32.totalorder %s10, 0
    %p44 = por %p42, %p43
    %p45 = scmp.ne.s32.totalorder %s34, %s37
    %p46 = scmp.eq.s32.totalorder %s15, 1
    %p47 = por %p45, %p46
    %p48 = scmp.ne.s32.totalorder %s37, %s38
    %p49 = scmp.eq.s32.totalorder %s15, 0
    %p50 = por %p48, %p49
    %p51 = scmp.ne.s32.totalorder %s37, %s38
    %p52 = scmp.eq.s32.totalorder %s16, 1
    %p53 = por %p51, %p52
    %p55 = scmp.ne.s32.totalorder %s38, %s54
    %p56 = scmp.eq.s32.totalorder %s16, 0
    %p57 = por %p55, %p56
    %s59 = sadd.s32 %s58, 1
    %p62 = scmp.eq.s32.totalorder %s10, 1
    %p63 = scmp.ne.s32.totalorder %s58, %s60
    %p64 = scmp.eq.s32.totalorder %s10, 0
    %p65 = por %p63, %p64
    %p66 = scmp.ne.s32.totalorder %s58, %s60
    %p67 = scmp.eq.s32.totalorder %s15, 1
    %p68 = por %p66, %p67
    %p69 = scmp.ne.s32.totalorder %s60, %s61
    %p70 = scmp.eq.s32.totalorder %s15, 0
    %p71 = por %p69, %p70
    %p72 = scmp.ne.s32.totalorder %s60, %s61
    %p73 = scmp.eq.s32.totalorder %s16, 1
    %p74 = por %p72, %p73
    %p76 = scmp.ne.s32.totalorder %s61, %s75
    %p77 = scmp.eq.s32.totalorder %s16, 0
    %p78 = por %p76, %p77
    %s80 = sadd.s32 %s79, 1
    %p83 = scmp.eq.s32.totalorder %s10, 1
    %p84 = scmp.ne.s32.totalorder %s79, %s81
    %p85 = scmp.eq.s32.totalorder %s10, 0
    %p86 = por %p84, %p85
    %p87 = scmp.ne.s32.totalorder %s79, %s81
    %p88 = scmp.eq.s32.totalorder %s15, 1
    %p89 = por %p87, %p88
    %p90 = scmp.ne.s32.totalorder %s81, %s82
    %p91 = scmp.eq.s32.totalorder %s15, 0
    %p92 = por %p90, %p91
    %p93 = scmp.ne.s32.totalorder %s81, %s82
    %p94 = scmp.eq.s32.totalorder %s16, 1
    %p95 = por %p93, %p94
    %p97 = scmp.ne.s32.totalorder %s82, %s96
    %p98 = scmp.eq.s32.totalorder %s16, 0
    %p99 = por %p97, %p98
    %s101 = sadd.s32 %s100, 1
    %p104 = scmp.eq.s32.totalorder %s10, 1
    %p105 = scmp.ne.s32.totalorder %s100, %s102
    %p106 = scmp.eq.s32.totalorder %s10, 0
    %p107 = por %p105, %p106
    %p108 = scmp.ne.s32.totalorder %s100, %s102
    %p109 = scmp.eq.s32.totalorder %s15, 1
    %p110 = por %p108, %p109
    %p111 = scmp.ne.s32.totalorder %s102, %s103
    %p112 = scmp.eq.s32.totalorder %s15, 0
    %p113 = por %p111, %p112
    %p114 = scmp.ne.s32.totalorder %s102, %s103
    %p115 = scmp.eq.s32.totalorder %s16, 1
    %p116 = por %p114, %p115
    %p118 = scmp.ne.s32.totalorder %s103, %s117
    %p119 = scmp.eq.s32.totalorder %s16, 0
    %p120 = por %p118, %p119
    %s121 = ssub.s32 %s17, %s29
    %s122 = ssub.s32 %s18, %s25
    %s123 = sor.u32 %s121, %s122
    %p124 = scmp.eq.s32.totalorder %s123, 0
    %s126 = sadd.s32 %s125, 1
    %s127 = scalar_select %p124, %s125, %s126
    %p130 = pneg %p124
    %p131 = scmp.eq.s32.totalorder %s10, 1
    %p132 = por %p130, %p131
    %p133 = scmp.ne.s32.totalorder %s125, %s128
    %p134 = scmp.eq.s32.totalorder %s10, 0
    %p135 = por %p133, %p134
    %p136 = scmp.ne.s32.totalorder %s125, %s128
    %p137 = scmp.eq.s32.totalorder %s15, 1
    %p138 = por %p136, %p137
    %p139 = scmp.ne.s32.totalorder %s128, %s129
    %p140 = scmp.eq.s32.totalorder %s15, 0
    %p141 = por %p139, %p140
    %p142 = scmp.ne.s32.totalorder %s128, %s129
    %p143 = scmp.eq.s32.totalorder %s16, 1
    %p144 = por %p142, %p143
    %p146 = scmp.ne.s32.totalorder %s129, %s145
    %p147 = scmp.eq.s32.totalorder %s16, 0
    %p148 = por %p146, %p147
    %p149 = scmp.le.s32.totalorder 1, %s10
    %p150 = scmp.lt.s32.totalorder %s10, 3
    %p151 = pnand %p149, %p150
    %p152 = pneg %p151
    // Predicated region
    $region9: #{_lambda_.18} parent=5 // pred_check
      _
    $region10: #{_lambda_.18} parent=5 // pred_check_branch
      %154 = sbr.rel (%p151) target = $region12
    $region11: #{_lambda_.18} parent=5 // pred_region
      %s155 = ssub.s32 %s10, 1
      // Predicated region
      $region13: #{_lambda_.18} parent=11 // pred_check
        %p156 = pneg %p71
      $region14: #{_lambda_.18} parent=11 // pred_check_branch
        %158 = sbr.rel (%p156) target = $region16
      $region15: #{_lambda_.18} parent=11 // pred_region
        _
      $region16: #{_lambda_.18} parent=11 // pred_fallthru
        _
      // Predicated region
      $region17: #{_lambda_.18} parent=11 // pred_check
        %p159 = pneg %p92
      $region18: #{_lambda_.18} parent=11 // pred_check_branch
        %161 = sbr.rel (%p159) target = $region20
      $region19: #{_lambda_.18} parent=11 // pred_region
        _
      $region20: #{_lambda_.18} parent=11 // pred_fallthru
        _
      // Predicated region
      $region21: #{_lambda_.18} parent=11 // pred_check
        %p162 = pneg %p113
      $region22: #{_lambda_.18} parent=11 // pred_check_branch
        %164 = sbr.rel (%p162) target = $region24
      $region23: #{_lambda_.18} parent=11 // pred_region
        _
      $region24: #{_lambda_.18} parent=11 // pred_fallthru
        _
    $region12: #{_lambda_.18} parent=5 // pred_fallthru
      _
    %p165 = scmp.lt.s32.totalorder %s10, 2
    // Predicated region
    $region25: #{_lambda_.18} parent=5 // pred_check
      %p166 = pneg %p165
    $region26: #{_lambda_.18} parent=5 // pred_check_branch
      %168 = sbr.rel (%p166) target = $region28
    $region27: #{_lambda_.18} parent=5 // pred_region
      // Predicated region
      $region29: #{_lambda_.18} parent=27 // pred_check
        %p169 = pneg %p44
      $region30: #{_lambda_.18} parent=27 // pred_check_branch
        %171 = sbr.rel (%p169) target = $region32
      $region31: #{_lambda_.18} parent=27 // pred_region
        %s172 = smul.u32 2, %s18
        %p173 = scmp.lt.s32.totalorder %s17, 1
        %s174 = scalar_select %p173, %s17, 1
        %p175 = scmp.lt.s32.totalorder %s172, 1
        %s176 = scalar_select %p175, %s172, 1
        %s177 = smul.addr %s174, 2
        %s178 = sadd.s32 %s176, %s177
        %s179 = smul.addr %s178, 2
        %s180 = scalar_lea.vmem %s0, %s179
        %s181 = smul.u32 2, %s18
      $region32: #{_lambda_.18} parent=27 // pred_fallthru
        _
    $region28: #{_lambda_.18} parent=5 // pred_fallthru
      _
    %p182 = scmp.le.s32.totalorder 1, %s10
    %p183 = scmp.lt.s32.totalorder %s10, 3
    %p184 = pnand %p182, %p183
    %p185 = pneg %p184
    // Predicated region
    $region33: #{_lambda_.18} parent=5 // pred_check
      _
    $region34: #{_lambda_.18} parent=5 // pred_check_branch
      %187 = sbr.rel (%p184) target = $region36
    $region35: #{_lambda_.18} parent=5 // pred_region
      %s188 = ssub.s32 %s10, 1
      %s189 = smul.u32 2, %s20
      %p190 = scmp.lt.s32.totalorder %s19, 1
      %s191 = scalar_select %p190, %s19, 1
      %p192 = scmp.lt.s32.totalorder %s189, 1
      %s193 = scalar_select %p192, %s189, 1
      %s194 = smul.addr %s191, 2
      %s195 = sadd.s32 %s193, %s194
      %s196 = smul.addr %s195, 2
      %s197 = scalar_lea.vmem %s0, %s196
      %p198 = pneg %p50
      %p199 = pneg %p47
      %p200 = pneg %p71
      %p201 = pneg %p68
      %p202 = pneg %p92
      %p203 = pneg %p89
      %p204 = pneg %p113
      %p205 = pneg %p110
      %p206 = pneg %p141
      %p207 = pneg %p138
      %s208 = smul.u32 2, %s20
      %p209 = scmp.lt.s32.totalorder %s19, 1
      %s210 = scalar_select %p209, %s19, 1
      %p211 = scmp.lt.s32.totalorder %s208, 1
      %s212 = scalar_select %p211, %s208, 1
      %s213 = smul.addr %s210, 2
      %s214 = sadd.s32 %s212, %s213
      %s215 = smul.addr %s214, 2
      %s216 = scalar_lea.vmem %s4, %s215
      %s217 = smul.u32 2, %s20
      %p218 = scmp.lt.s32.totalorder %s19, 1
      %s219 = scalar_select %p218, %s19, 1
      %p220 = scmp.lt.s32.totalorder %s217, 1
      %s221 = scalar_select %p220, %s217, 1
      %s222 = smul.addr %s219, 2
      %s223 = sadd.s32 %s221, %s222
      %s224 = smul.addr %s223, 2
      %s225 = scalar_lea.vmem %s0, %s224
      %s226 = smul.u32 2, %s20
      %s227 = smul.u32 2, %s20
      %p228 = scmp.lt.s32.totalorder %s19, 1
      %s229 = scalar_select %p228, %s19, 1
      %p230 = scmp.lt.s32.totalorder %s227, 1
      %s231 = scalar_select %p230, %s227, 1
      %s232 = smul.addr %s229, 2
      %s233 = sadd.s32 %s231, %s232
      %s234 = smul.addr %s233, 2
      %s235 = scalar_lea.vmem %s4, %s234
      %s236 = smul.u32 2, %s20
      %v237 = vld [vmem:[%s225] sm:$0xf]
      %v238 = vld [vmem:[%s1] sm:$0x3]
      %240 = vset.pattern.permute.xlu0 0
      %241 = vperm.xlu0 %240, %v238
      %v242 = vpop.permute.xlu0 %241
      %v244 = vunpack.c.l.s4 269488144
      %v245 = vunpack.c.0.s8 %v244
      %v246 = vlaneseq
      %v247 = vshrl.u32 %v246, 7
      %v248 = vsub.s32 %v245, %v247
      %v249 = vrot.slane %v242, %v248
      %v251 = vmul.f32 %v237, %v249
      %v252 = vld [vmem:[%s2] sm:$0x3]
      %254 = vset.pattern.permute.xlu0 0
      %255 = vperm.xlu0 %254, %v252
      %v256 = vpop.permute.xlu0 %255
      %v258 = vunpack.c.l.s4 269488144
      %v259 = vunpack.c.0.s8 %v258
      %v260 = vlaneseq
      %v261 = vshrl.u32 %v260, 7
      %v262 = vsub.s32 %v259, %v261
      %v263 = vrot.slane %v256, %v262
      %v265 = vadd.f32 %v251, %v263
      %vm266 = vcmp.gt.f32.partialorder %v265, 0.0
      %v267 = vld [vmem:[%s3] sm:$0x3]
      %269 = vset.pattern.permute.xlu0 0
      %270 = vperm.xlu0 %269, %v267
      %v271 = vpop.permute.xlu0 %270
      %v275 = vunpack.c.l.s4 1983009808
      %v276 = vunpack.c.0.s8 %v275
      %v277 = vlaneseq
      %v278 = vshrl.u32 %v277, 7
      %v279 = vsub.s32 %v276, %v278
      %v280 = vrot.slane %v265, %v279
      %v281 = vcombine.high %v280, %v280
      %v284 = vmul.f32 %v271, %v280
      %v285 = vmul.f32 %v271, %v281
      %v288 = vcombine.low %v284, %v285
      %v290 = vunpack.c.l.s4 1983009808
      %v291 = vunpack.c.0.s8 %v290
      %v292 = vlaneseq
      %v293 = vshrl.u32 %v292, 7
      %v294 = vsub.s32 %v291, %v293
      %v295 = vrot.slane %v288, %v294
      %v297 = vsel %vm266, %v265, %v295
      %298 = vst [vmem:[%s235] sm:$0xf] %v297
      %s299 = smul.u32 2, %s20
      %p300 = scmp.lt.s32.totalorder %s19, 1
      %s301 = scalar_select %p300, %s19, 1
      %p302 = scmp.lt.s32.totalorder %s299, 1
      %s303 = scalar_select %p302, %s299, 1
      %s304 = smul.addr %s301, 2
      %s305 = sadd.s32 %s303, %s304
      %s306 = smul.addr %s305, 2
      %s307 = scalar_lea.vmem %s4, %s306
      // Predicated region
      $region37: #{_lambda_.18} parent=35 // pred_check
        %p308 = pneg %p138
      $region38: #{_lambda_.18} parent=35 // pred_check_branch
        %310 = sbr.rel (%p308) target = $region40
      $region39: #{_lambda_.18} parent=35 // pred_region
        %s311 = smul.u32 2, %s20
      $region40: #{_lambda_.18} parent=35 // pred_fallthru
        _
    $region36: #{_lambda_.18} parent=5 // pred_fallthru
      _
    %p312 = scmp.le.s32.totalorder 2, %s10
    // Predicated region
    $region41: #{_lambda_.18} parent=5 // pred_check
      %p313 = pneg %p312
    $region42: #{_lambda_.18} parent=5 // pred_check_branch
      %315 = sbr.rel (%p313) target = $region44
    $region43: #{_lambda_.18} parent=5 // pred_region
      %s316 = ssub.s32 %s10, 2
      // Predicated region
      $region45: #{_lambda_.18} parent=43 // pred_check
        %p317 = pneg %p144
      $region46: #{_lambda_.18} parent=43 // pred_check_branch
        %319 = sbr.rel (%p317) target = $region48
      $region47: #{_lambda_.18} parent=43 // pred_region
        %s320 = smul.u32 2, %s22
        %p321 = scmp.lt.s32.totalorder %s21, 1
        %s322 = scalar_select %p321, %s21, 1
        %p323 = scmp.lt.s32.totalorder %s320, 1
        %s324 = scalar_select %p323, %s320, 1
        %s325 = smul.addr %s322, 2
        %s326 = sadd.s32 %s324, %s325
        %s327 = smul.addr %s326, 2
        %s328 = scalar_lea.vmem %s4, %s327
      $region48: #{_lambda_.18} parent=43 // pred_fallthru
        _
    $region44: #{_lambda_.18} parent=5 // pred_fallthru
      _
  $region6: #{_lambda_.18} parent=0 // loop_footer
    %s14 = sadd.s32 1, %s10
  $region7: #{_lambda_.18} parent=0 // loop_footer_branch
    %9 = sbr.rel target = $region3
  $region8: #{_lambda_.18} parent=0 // loop_exit
    _

// kernel: _lambda_.25
$region0: #{_lambda_.25}
  #allocation0 [shape = 'u32[]', space=smem, size = 0x4, offset = 0x4, fixed_abs, tag = 'smem constant byte address 0x4 - core index']
  #allocation1 [shape = 'u32[144,128]{1,0:T(1,128)}', space=vmem, size = 0x12000, scoped, tag = 'internal scratch']
  %s0 = inlined_call_operand.vmem [shape: f32[4,12], index: 0, kind: input, shape index: {}]
  %s1 = inlined_call_operand.vmem [shape: f32[2,12,256], index: 1, kind: input, shape index: {}]
  %s2 = inlined_call_operand.vmem [shape: f32[2,4,256], index: 2, kind: output, shape index: {}]
  %s3 = sld [smem:[#allocation0]]
  $region41: #{_lambda_.25} parent=0
    _
  %s5 = ssub.s32 1, %s3
  %s6 = scalar_select 0, %s5, %s3
  loop: start=0, step=1, limit=4
  $region2: #{_lambda_.25} parent=0 // loop_pre_header
    _
  $region3: #{_lambda_.25} parent=0 // loop_header
    %s8 = sphi 0, %s12
    %p9 = scmp.ge.s32.totalorder %s8, 4
    %s15 = sphi 0, %s27
    %s16 = sphi 0, %s23
    %s17 = sphi 0, %s15
    %s18 = sphi 0, %s16
    %s19 = sphi 0, %s17
    %s20 = sphi 0, %s18
    %s28 = sphi 0, %s28
    %s30 = sphi 0, %s28
    %s31 = sphi 0, %s30
    %s45 = sphi 0, %s31
    %s53 = sphi 0, %s55
    %s56 = sphi 0, %s53
    %s57 = sphi 0, %s56
    %s73 = sphi 0, %s57
    %s81 = sphi 0, %s83
    %s84 = sphi 0, %s81
    %s85 = sphi 0, %s84
    %s101 = sphi 0, %s85
  $region4: #{_lambda_.25} parent=0 // loop_header_branch
    %11 = sbr.rel (%p9) target = $region8
  $region5: #{_lambda_.25} parent=0 // loop_body
    %s13 = ssub.s32 %s8, 1
    %s14 = ssub.s32 %s8, 2
    %s21 = sadd.s32 1, %s16
    %p22 = scmp.ge.s32.totalorder %s21, 1
    %s23 = scalar_select %p22, 0, %s21
    %s24 = sadd.s32 1, %s15
    %s25 = scalar_select %p22, %s24, %s15
    %p26 = scmp.ge.s32.totalorder %s25, 2
    %s27 = scalar_select %p26, 0, %s25
    %s29 = sadd.s32 %s28, 1
    %p32 = scmp.eq.s32.totalorder %s8, 1
    %p33 = scmp.ne.s32.totalorder %s28, %s30
    %p34 = scmp.eq.s32.totalorder %s8, 0
    %p35 = por %p33, %p34
    %p36 = scmp.ne.s32.totalorder %s28, %s30
    %p37 = scmp.eq.s32.totalorder %s13, 1
    %p38 = por %p36, %p37
    %p39 = scmp.ne.s32.totalorder %s30, %s31
    %p40 = scmp.eq.s32.totalorder %s13, 0
    %p41 = por %p39, %p40
    %p42 = scmp.ne.s32.totalorder %s30, %s31
    %p43 = scmp.eq.s32.totalorder %s14, 1
    %p44 = por %p42, %p43
    %p46 = scmp.ne.s32.totalorder %s31, %s45
    %p47 = scmp.eq.s32.totalorder %s14, 0
    %p48 = por %p46, %p47
    %s49 = ssub.s32 %s15, %s27
    %s50 = ssub.s32 %s16, %s23
    %s51 = sor.u32 %s49, %s50
    %p52 = scmp.eq.s32.totalorder %s51, 0
    %s54 = sadd.s32 %s53, 1
    %s55 = scalar_select %p52, %s53, %s54
    %p58 = pneg %p52
    %p59 = scmp.eq.s32.totalorder %s8, 1
    %p60 = por %p58, %p59
    %p61 = scmp.ne.s32.totalorder %s53, %s56
    %p62 = scmp.eq.s32.totalorder %s8, 0
    %p63 = por %p61, %p62
    %p64 = scmp.ne.s32.totalorder %s53, %s56
    %p65 = scmp.eq.s32.totalorder %s13, 1
    %p66 = por %p64, %p65
    %p67 = scmp.ne.s32.totalorder %s56, %s57
    %p68 = scmp.eq.s32.totalorder %s13, 0
    %p69 = por %p67, %p68
    %p70 = scmp.ne.s32.totalorder %s56, %s57
    %p71 = scmp.eq.s32.totalorder %s14, 1
    %p72 = por %p70, %p71
    %p74 = scmp.ne.s32.totalorder %s57, %s73
    %p75 = scmp.eq.s32.totalorder %s14, 0
    %p76 = por %p74, %p75
    %s77 = ssub.s32 %s15, %s27
    %s78 = ssub.s32 %s16, %s23
    %s79 = sor.u32 %s77, %s78
    %p80 = scmp.eq.s32.totalorder %s79, 0
    %s82 = sadd.s32 %s81, 1
    %s83 = scalar_select %p80, %s81, %s82
    %p86 = pneg %p80
    %p87 = scmp.eq.s32.totalorder %s8, 1
    %p88 = por %p86, %p87
    %p89 = scmp.ne.s32.totalorder %s81, %s84
    %p90 = scmp.eq.s32.totalorder %s8, 0
    %p91 = por %p89, %p90
    %p92 = scmp.ne.s32.totalorder %s81, %s84
    %p93 = scmp.eq.s32.totalorder %s13, 1
    %p94 = por %p92, %p93
    %p95 = scmp.ne.s32.totalorder %s84, %s85
    %p96 = scmp.eq.s32.totalorder %s13, 0
    %p97 = por %p95, %p96
    %p98 = scmp.ne.s32.totalorder %s84, %s85
    %p99 = scmp.eq.s32.totalorder %s14, 1
    %p100 = por %p98, %p99
    %p102 = scmp.ne.s32.totalorder %s85, %s101
    %p103 = scmp.eq.s32.totalorder %s14, 0
    %p104 = por %p102, %p103
    %p105 = scmp.le.s32.totalorder 1, %s8
    %p106 = scmp.lt.s32.totalorder %s8, 3
    %p107 = pnand %p105, %p106
    %p108 = pneg %p107
    // Predicated region
    $region9: #{_lambda_.25} parent=5 // pred_check
      _
    $region10: #{_lambda_.25} parent=5 // pred_check_branch
      %110 = sbr.rel (%p107) target = $region12
    $region11: #{_lambda_.25} parent=5 // pred_region
      %s111 = ssub.s32 %s8, 1
      // Predicated region
      $region13: #{_lambda_.25} parent=11 // pred_check
        %p112 = pneg %p41
      $region14: #{_lambda_.25} parent=11 // pred_check_branch
        %114 = sbr.rel (%p112) target = $region16
      $region15: #{_lambda_.25} parent=11 // pred_region
        _
      $region16: #{_lambda_.25} parent=11 // pred_fallthru
        _
    $region12: #{_lambda_.25} parent=5 // pred_fallthru
      _
    %p115 = scmp.lt.s32.totalorder %s8, 2
    // Predicated region
    $region17: #{_lambda_.25} parent=5 // pred_check
      %p116 = pneg %p115
    $region18: #{_lambda_.25} parent=5 // pred_check_branch
      %118 = sbr.rel (%p116) target = $region20
    $region19: #{_lambda_.25} parent=5 // pred_region
      // Predicated region
      $region21: #{_lambda_.25} parent=19 // pred_check
        %p119 = pneg %p63
      $region22: #{_lambda_.25} parent=19 // pred_check_branch
        %121 = sbr.rel (%p119) target = $region24
      $region23: #{_lambda_.25} parent=19 // pred_region
        %s122 = smul.u32 2, %s16
        %p123 = scmp.lt.s32.totalorder %s15, 1
        %s124 = scalar_select %p123, %s15, 1
        %p125 = scmp.lt.s32.totalorder %s122, 1
        %s126 = scalar_select %p125, %s122, 1
        %s127 = smul.addr %s124, 4
        %s128 = sadd.s32 %s126, %s127
        %s129 = smul.addr %s128, 8
        %s130 = scalar_lea.vmem %s1, %s129
        %s131 = smul.u32 2, %s16
      $region24: #{_lambda_.25} parent=19 // pred_fallthru
        _
    $region20: #{_lambda_.25} parent=5 // pred_fallthru
      _
    %p132 = scmp.le.s32.totalorder 1, %s8
    %p133 = scmp.lt.s32.totalorder %s8, 3
    %p134 = pnand %p132, %p133
    %p135 = pneg %p134
    // Predicated region
    $region25: #{_lambda_.25} parent=5 // pred_check
      _
    $region26: #{_lambda_.25} parent=5 // pred_check_branch
      %137 = sbr.rel (%p134) target = $region28
    $region27: #{_lambda_.25} parent=5 // pred_region
      %s138 = ssub.s32 %s8, 1
      %p139 = pneg %p41
      %p140 = pneg %p38
      %s141 = smul.u32 2, %s18
      %p142 = scmp.lt.s32.totalorder %s17, 1
      %s143 = scalar_select %p142, %s17, 1
      %p144 = scmp.lt.s32.totalorder %s141, 1
      %s145 = scalar_select %p144, %s141, 1
      %s146 = smul.addr %s143, 4
      %s147 = sadd.s32 %s145, %s146
      %s148 = smul.addr %s147, 8
      %s149 = scalar_lea.vmem %s1, %s148
      %p150 = pneg %p69
      %p151 = pneg %p66
      %p152 = pneg %p97
      %p153 = pneg %p94
      %s154 = smul.u32 2, %s18
      %p155 = scmp.lt.s32.totalorder %s17, 1
      %s156 = scalar_select %p155, %s17, 1
      %p157 = scmp.lt.s32.totalorder %s154, 1
      %s158 = scalar_select %p157, %s154, 1
      %s159 = smul.addr %s156, 2
      %s160 = sadd.s32 %s158, %s159
      %s161 = smul.addr %s160, 4
      %s162 = scalar_lea.vmem %s2, %s161
      %s163 = smul.u32 2, %s18
      %p164 = scmp.lt.s32.totalorder %s17, 1
      %s165 = scalar_select %p164, %s17, 1
      %p166 = scmp.lt.s32.totalorder %s163, 1
      %s167 = scalar_select %p166, %s163, 1
      %s168 = smul.addr %s165, 4
      %s169 = sadd.s32 %s167, %s168
      %s170 = smul.addr %s169, 8
      %s171 = scalar_lea.vmem %s1, %s170
      %s172 = smul.u32 2, %s18
      %s173 = smul.u32 2, %s18
      %p174 = scmp.lt.s32.totalorder %s17, 1
      %s175 = scalar_select %p174, %s17, 1
      %p176 = scmp.lt.s32.totalorder %s173, 1
      %s177 = scalar_select %p176, %s173, 1
      %s178 = smul.addr %s175, 2
      %s179 = sadd.s32 %s177, %s178
      %s180 = smul.addr %s179, 4
      %s181 = scalar_lea.vmem %s2, %s180
      %s182 = smul.u32 2, %s18
      %v183 = vld [vmem:[%s0] sm:$0xf]
      %v184 = vld [vmem:[%s171] sm:$0xff]
      %v185 = vld [vmem:[%s171 + $0x8] sm:$0xff]
      %v186 = vld [vmem:[%s171 + $0x10] sm:$0xf]
      %v187 = vld [vmem:[%s171 + $0x18] sm:$0xf]
      %vm188 = vcmask 97280
      %v190 = vsel %vm188, %v183, 0
      %vm192 = vcmask 1043456
      %v194 = vsel %vm192, %v186, 0
      %v197 = vsel %vm192, %v187, 0
      %199 = vmatprep.subr.mxu0 0.0
      %200 = vmatpush1.msra.mxu0 0.0
      %201 = vmatprep.subr.mxu0 0.0
      %202 = vmatpush1.msra.mxu0 0.0
      %203 = vmatprep.subr.mxu0 0.0
      %204 = vmatpush1.msra.mxu0 0.0
      %205 = vmatprep.subr.mxu0 0.0
      %206 = vmatpush1.msra.mxu0 0.0
      %207 = vmatprep.subr.mxu0 0.0
      %208 = vmatpush1.msra.mxu0 0.0
      %209 = vmatprep.subr.mxu0 0.0
      %210 = vmatpush1.msra.mxu0 0.0
      %211 = vmatprep.subr.mxu0 0.0
      %212 = vmatpush1.msra.mxu0 0.0
      %213 = vmatprep.subr.mxu0 0.0
      %214 = vmatpush1.msra.mxu0 0.0
      %215 = vmatprep.subr.mxu0 0.0
      %216 = vmatpush1.msra.mxu0 0.0
      %217 = vmatprep.subr.mxu0 0.0
      %218 = vmatpush1.msra.mxu0 0.0
      %219 = vmatprep.subr.mxu0 0.0
      %220 = vmatpush1.msra.mxu0 0.0
      %221 = vmatprep.subr.mxu0 0.0
      %222 = vmatpush1.msra.mxu0 0.0
      %223 = vmatprep.subr.mxu0 0.0
      %224 = vmatpush1.msra.mxu0 0.0
      %225 = vmatprep.subr.mxu0 0.0
      %226 = vmatpush1.msra.mxu0 0.0
      %227 = vmatprep.subr.mxu0 %v197
      %228 = vmatpush1.msra.mxu0 %v194
      %229 = vmatprep.subr.mxu0 %v185
      %230 = vmatpush1.msra.mxu0 %v184
      %231 = vmatprep.subr.mxu0 0.0
      %232 = vmatpush2.msra.mxu0 0.0
      %233 = vmatprep.subr.mxu0 0.0
      %234 = vmatpush2.msra.mxu0 0.0
      %235 = vmatprep.subr.mxu0 0.0
      %236 = vmatpush2.msra.mxu0 0.0
      %237 = vmatprep.subr.mxu0 0.0
      %238 = vmatpush2.msra.mxu0 0.0
      %239 = vmatprep.subr.mxu0 0.0
      %240 = vmatpush2.msra.mxu0 0.0
      %241 = vmatprep.subr.mxu0 0.0
      %242 = vmatpush2.msra.mxu0 0.0
      %243 = vmatprep.subr.mxu0 0.0
      %244 = vmatpush2.msra.mxu0 0.0
      %245 = vmatprep.subr.mxu0 0.0
      %246 = vmatpush2.msra.mxu0 0.0
      %247 = vmatprep.subr.mxu0 0.0
      %248 = vmatpush2.msra.mxu0 0.0
      %249 = vmatprep.subr.mxu0 0.0
      %250 = vmatpush2.msra.mxu0 0.0
      %251 = vmatprep.subr.mxu0 0.0
      %252 = vmatpush2.msra.mxu0 0.0
      %253 = vmatprep.subr.mxu0 0.0
      %254 = vmatpush2.msra.mxu0 0.0
      %255 = vmatprep.subr.mxu0 0.0
      %256 = vmatpush2.msra.mxu0 0.0
      %257 = vmatprep.subr.mxu0 0.0
      %258 = vmatpush2.msra.mxu0 0.0
      %259 = vmatprep.subr.mxu0 0.0
      %260 = vmatpush2.msra.mxu0 0.0
      %261 = vmatprep.subr.mxu0 0.0
      %262 = vmatpush2.msra.mxu0 0.0
      %263 = vmatprep.mubr.f32.mxu0 0.0
      %264 = vmatmul.mubr.f32.gmra.mxu0 %v190
      %v265 = vpop.f32.mrf.mxu0
      %v266 = vadd.f32 0.0, %v265
      %v267 = vpop.f32.mrf.mxu0
      %v268 = vadd.f32 0.0, %v267
      %269 = vdwg.mxu0
      %v272 = vcombine.low %v266, %v268
      %274 = vst [vmem:[%s181] sm:$0xff] %v272
      %s275 = smul.u32 2, %s18
      %p276 = scmp.lt.s32.totalorder %s17, 1
      %s277 = scalar_select %p276, %s17, 1
      %p278 = scmp.lt.s32.totalorder %s275, 1
      %s279 = scalar_select %p278, %s275, 1
      %s280 = smul.addr %s277, 2
      %s281 = sadd.s32 %s279, %s280
      %s282 = smul.addr %s281, 4
      %s283 = scalar_lea.vmem %s2, %s282
      // Predicated region
      $region29: #{_lambda_.25} parent=27 // pred_check
        %p284 = pneg %p94
      $region30: #{_lambda_.25} parent=27 // pred_check_branch
        %286 = sbr.rel (%p284) target = $region32
      $region31: #{_lambda_.25} parent=27 // pred_region
        %s287 = smul.u32 2, %s18
      $region32: #{_lambda_.25} parent=27 // pred_fallthru
        _
    $region28: #{_lambda_.25} parent=5 // pred_fallthru
      _
    %p288 = scmp.le.s32.totalorder 2, %s8
    // Predicated region
    $region33: #{_lambda_.25} parent=5 // pred_check
      %p289 = pneg %p288
    $region34: #{_lambda_.25} parent=5 // pred_check_branch
      %291 = sbr.rel (%p289) target = $region36
    $region35: #{_lambda_.25} parent=5 // pred_region
      %s292 = ssub.s32 %s8, 2
      // Predicated region
      $region37: #{_lambda_.25} parent=35 // pred_check
        %p293 = pneg %p100
      $region38: #{_lambda_.25} parent=35 // pred_check_branch
        %295 = sbr.rel (%p293) target = $region40
      $region39: #{_lambda_.25} parent=35 // pred_region
        %s296 = smul.u32 2, %s20
        %p297 = scmp.lt.s32.totalorder %s19, 1
        %s298 = scalar_select %p297, %s19, 1
        %p299 = scmp.lt.s32.totalorder %s296, 1
        %s300 = scalar_select %p299, %s296, 1
        %s301 = smul.addr %s298, 2
        %s302 = sadd.s32 %s300, %s301
        %s303 = smul.addr %s302, 4
        %s304 = scalar_lea.vmem %s2, %s303
      $region40: #{_lambda_.25} parent=35 // pred_fallthru
        _
    $region36: #{_lambda_.25} parent=5 // pred_fallthru
      _
  $region6: #{_lambda_.25} parent=0 // loop_footer
    %s12 = sadd.s32 1, %s8
  $region7: #{_lambda_.25} parent=0 // loop_footer_branch
    %7 = sbr.rel target = $region3
  $region8: #{_lambda_.25} parent=0 // loop_exit
    _

</llo_original>
